<compile_context>
chip_gen: v6e
topology: v6e:2x2x1
jax: 0.10.0
libtpu: 0.0.40
codegen_flags: <defaults>
</compile_context>

<pallas_src>
import functools

import jax
import jax.numpy as jnp
from jax.experimental import pallas as pl
from jax.experimental.pallas import tpu as pltpu

EPS = 1e-5


def _round_up(x, m):
    return ((x + m - 1) // m) * m


def predictor_kernel(x_ref, w1_ref, gamma_ref, beta_ref, w2_ref, b2_ref, o_ref,
                     *, mxu_stats):
    """One (core-split c, hidden-tile k) grid step.

    Grid: (core_splits ["parallel"], hidden_tiles_per_split ["arbitrary"]).
    The output block index depends only on c, so o_ref stays resident in VMEM
    across the hidden reduction and is used directly as the f32 accumulator.
    """
    c = pl.program_id(0)
    k = pl.program_id(1)

    # Initialise the resident accumulator on the first hidden tile of each
    # core split. Split 0 starts from the layer-2 bias (so no finalize pass is
    # needed); the other splits start from zero and are summed in the wrapper.
    @pl.when(jnp.logical_and(k == 0, c == 0))
    def _init_with_bias():
        o_ref[...] = jnp.broadcast_to(b2_ref[...], o_ref.shape)

    @pl.when(jnp.logical_and(k == 0, c != 0))
    def _init_with_zero():
        o_ref[...] = jnp.zeros_like(o_ref)

    # ---- layer1 Linear for this hidden tile (bf16 MXU inputs, f32 accumulate).
    # x is already bf16 (cast once in the wrapper). The layer-1 bias is
    # omitted: the *training-mode* BatchNorm below subtracts the batch mean,
    # which cancels any per-feature constant exactly.
    h = jnp.dot(x_ref[...], w1_ref[...], preferred_element_type=jnp.float32)

    # ---- BatchNorm1d (training mode, biased variance) folded to scale/shift.
    # Stats are per-hidden-feature over the full (resident) batch, so tiling
    # the hidden dimension (and splitting tiles across cores) is exact.
    batch = x_ref.shape[0]
    if mxu_stats:
        # Batch-axis moment sums as tiny matmuls: keeps the cross-sublane
        # reductions off the VPU/XLU (idle MXU cycles instead).
        ones_row = jnp.ones((1, batch), dtype=jnp.float32)
        mean = jnp.dot(ones_row, h, precision=jax.lax.Precision.HIGHEST,
                       preferred_element_type=jnp.float32) * (1.0 / batch)
        mean_sq = jnp.dot(ones_row, h * h, precision=jax.lax.Precision.HIGHEST,
                          preferred_element_type=jnp.float32) * (1.0 / batch)
    else:
        mean = jnp.mean(h, axis=0, keepdims=True)           # [1, block_h]
        mean_sq = jnp.mean(h * h, axis=0, keepdims=True)    # [1, block_h]

    # Clamp: E[h^2] - mean^2 can go slightly negative in f32 (cancellation).
    var = jnp.maximum(mean_sq - mean * mean, 0.0)
    scale = gamma_ref[...] * jax.lax.rsqrt(var + EPS)       # rsqrt -> EUP slot
    shift = beta_ref[...] - scale * mean
    h = jnp.maximum(h * scale + shift, 0.0)                 # BN FMA + ReLU

    # ---- layer2 Linear: partial sum over this hidden tile, accumulated
    # directly into the resident output block.
    o_ref[...] += jnp.dot(h.astype(jnp.bfloat16), w2_ref[...],
                          preferred_element_type=jnp.float32)


def pick_block_h(hidden, batch, core_splits=1):
    """Batch-aware hidden-tile size.

    The in-kernel temporaries (h, h*h, BN/ReLU result, the bf16 copy fed to
    the layer-2 matmul) are each roughly [batch, block_h] f32; keep ~4 copies
    inside a conservative VMEM share so the pick is safe on v7x (64 MiB
    physical / 32 MiB scoped) as well as v5e/v6e. Bigger tiles -> fewer grid
    steps (~0.35 us each) and longer uninterrupted MXU runs.
    """
    base = _round_up(hidden, 128 * core_splits)
    budget = 16 << 20
    for cand in (1024, 512, 256, 128):
        if base % (cand * core_splits) == 0 and 4 * batch * cand * 4 <= budget:
            return cand
    return 128


def _vmem_limit_bytes(batch, in_pad, out_pad, block_h):
    """Explicit scoped-VMEM budget (the default limit — 16 MiB on v5e, 32 MiB
    on v6e/v7x — is what breaks first as the batch grows, even though the
    chips have more physical VMEM)."""
    resident = batch * in_pad * 2            # x, bf16, single-buffered
    resident += batch * out_pad * 4          # output accumulator, f32
    resident += out_pad * 4                  # b2
    tiles = 2 * in_pad * block_h * 2         # W1 tile, bf16, double-buffered
    tiles += 2 * block_h * out_pad * 2       # W2 tile, bf16, double-buffered
    tiles += 2 * 2 * block_h * 4             # gamma / beta tiles
    temps = 4 * batch * block_h * 4          # in-kernel f32 temporaries
    est = resident + tiles + temps
    return int(min(max(2 * est, 32 << 20), 128 << 20))


def prepare_predictor_params(w1, b1, gamma, beta, w2, b2, *, block_h=None,
                             core_splits=1, batch_hint=128):
    """Pad / cast the Predictor parameters ONCE (persist across forward calls).

    Weights are stored pre-transposed ([in, hidden] / [hidden, out]) so the
    kernel computes x @ W, zero-padded to lane-dense multiples of 128 and
    pre-cast to bfloat16 for the MXU. Doing this once avoids re-running the
    pad+cast HBM round trip on every call.

    b1 is accepted for interface parity but unused: with BatchNorm1d in
    TRAINING mode (batch statistics) the mean subtraction cancels any constant
    added per hidden feature. In eval mode (running stats) this would not
    hold — this kernel implements the training-mode forward only.
    """
    del b1  # cancelled by the training-mode BN mean subtraction (see above)
    in_dim, hidden = w1.shape
    out_dim = w2.shape[1]
    if block_h is None:
        block_h = pick_block_h(hidden, batch_hint, core_splits)
    assert block_h % 128 == 0

    in_pad = _round_up(in_dim, 128)
    out_pad = _round_up(out_dim, 128)
    hidden_pad = _round_up(hidden, block_h * core_splits)

    # Padded hidden features: h == 0 -> var == 0 (gamma padded with 1 keeps the
    # scale finite, beta padded with 0) -> BN/ReLU output 0 -> zero rows of W2
    # -> no contribution to the result.
    w1p = jnp.pad(w1.astype(jnp.bfloat16),
                  ((0, in_pad - in_dim), (0, hidden_pad - hidden)))
    gp = jnp.pad(gamma.reshape(1, -1).astype(jnp.float32),
                 ((0, 0), (0, hidden_pad - hidden)), constant_values=1.0)
    bp = jnp.pad(beta.reshape(1, -1).astype(jnp.float32),
                 ((0, 0), (0, hidden_pad - hidden)))
    w2p = jnp.pad(w2.astype(jnp.bfloat16),
                  ((0, hidden_pad - hidden), (0, out_pad - out_dim)))
    b2p = jnp.pad(b2.reshape(1, -1).astype(jnp.float32),
                  ((0, 0), (0, out_pad - out_dim)))
    return dict(w1=w1p, gamma=gp, beta=bp, w2=w2p, b2=b2p,
                in_dim=in_dim, hidden=hidden, out_dim=out_dim,
                in_pad=in_pad, hidden_pad=hidden_pad, out_pad=out_pad,
                block_h=block_h, core_splits=core_splits)


def predictor_apply(x, params):
    """Forward pass of the Predictor head using pre-padded params.

    x: [B, in_dim] f32 (padded + cast to bf16 here, once per call).
    Returns [B, out_dim] f32.
    """
    B, in_dim = x.shape
    assert in_dim == params["in_dim"]
    in_pad = params["in_pad"]
    out_pad = params["out_pad"]
    out_dim = params["out_dim"]
    block_h = params["block_h"]
    core_splits = params["core_splits"]
    num_h = params["hidden_pad"] // block_h
    tiles_per_split = num_h // core_splits

    # bf16 x: the MXU eats bf16 anyway; this halves the resident x footprint
    # and avoids re-casting it inside the kernel on every grid step.
    xp = jnp.pad(x, ((0, 0), (0, in_pad - in_dim))).astype(jnp.bfloat16)

    vmem_limit = _vmem_limit_bytes(B, in_pad, out_pad, block_h)
    h_map = lambda c, k: (0, c * tiles_per_split + k)       # W1 / gamma / beta
    w2_map = lambda c, k: (c * tiles_per_split + k, 0)      # W2
    const_map = lambda c, k: (0, 0)                         # x / b2 (resident)
    out_map = lambda c, k: (c, 0, 0)                        # per-split partial

    def run(aggressive):
        # aggressive=True: single-buffer the constant-index blocks (x, b2,
        # output) and compute the BN moments on the MXU. aggressive=False is a
        # conservative known-good configuration.
        def spec(shape, index_map, resident=False):
            if aggressive and resident:
                return pl.BlockSpec(shape, index_map, pipeline_mode=pl.Buffered(1))
            return pl.BlockSpec(shape, index_map)

        kernel = functools.partial(predictor_kernel, mxu_stats=aggressive)
        partials = pl.pallas_call(
            kernel,
            out_shape=jax.ShapeDtypeStruct((core_splits, B, out_pad), jnp.float32),
            grid=(core_splits, tiles_per_split),
            in_specs=[
                spec((B, in_pad), const_map, resident=True),      # x (bf16)
                spec((in_pad, block_h), h_map),                   # W1 tile (bf16)
                spec((1, block_h), h_map),                        # gamma tile
                spec((1, block_h), h_map),                        # beta tile
                spec((block_h, out_pad), w2_map),                 # W2 tile (bf16)
                spec((1, out_pad), const_map, resident=True),     # b2
            ],
            out_specs=spec((None, B, out_pad), out_map, resident=True),
            compiler_params=pltpu.CompilerParams(
                dimension_semantics=("parallel", "arbitrary"),
                vmem_limit_bytes=vmem_limit),
        )(xp, params["w1"], params["gamma"], params["beta"],
          params["w2"], params["b2"])
        return jax.block_until_ready(partials)

    try:
        partials = run(True)
    except Exception:  # pragma: no cover - fall back to the conservative config
        partials = run(False)

    # b2 is already baked into the split-0 partial.
    out = partials[0] if core_splits == 1 else jnp.sum(partials, axis=0)
    return out[:, :out_dim]


def predictor_forward(x, w1, b1, gamma, beta, w2, b2, *, block_h=None,
                      core_splits=1):
    """One-shot convenience wrapper (prepare + apply).

    For repeated calls, call `prepare_predictor_params` once and reuse it with
    `predictor_apply` so the weight pad/cast is not redone per call.
    core_splits=2 splits the hidden reduction across v7x's two TensorCores
    (each core owns whole hidden tiles, so BN stats stay exact); it is just a
    short serial loop on single-core chips.
    """
    if block_h is None:
        block_h = pick_block_h(w1.shape[1], x.shape[0], core_splits)
    params = prepare_predictor_params(w1, b1, gamma, beta, w2, b2,
                                      block_h=block_h, core_splits=core_splits)
    return predictor_apply(x, params)


def predictor_reference(x, w1, b1, gamma, beta, w2, b2):
    """Pure-JAX f32 reference with the module's exact semantics (incl. b1)."""
    h = x @ w1 + b1
    mean = jnp.mean(h, axis=0, keepdims=True)
    var = jnp.mean((h - mean) ** 2, axis=0, keepdims=True)
    h = (h - mean) / jnp.sqrt(var + EPS)
    h = h * gamma + beta
    h = jnp.maximum(h, 0.0)
    return h @ w2 + b2


if __name__ == "__main__":
    # Small shapes consistent with the module (in_dim -> hidden -> out),
    # exercising padding (in 64->128, out 48->128), a multi-tile hidden
    # reduction and the 2-way core split (hidden=256 / block_h=128 -> 2 tiles).
    B, in_dim, hidden_dim, out_dim = 16, 64, 256, 48

    key = jax.random.PRNGKey(0)
    kx, kw1, kb1, kg, kbeta, kw2, kb2 = jax.random.split(key, 7)

    x = jax.random.normal(kx, (B, in_dim), dtype=jnp.float32)

    # nn.Linear-style uniform init.
    lim1 = 1.0 / jnp.sqrt(in_dim)
    w1 = jax.random.uniform(kw1, (in_dim, hidden_dim), jnp.float32, -lim1, lim1)
    b1 = jax.random.uniform(kb1, (hidden_dim,), jnp.float32, -lim1, lim1)

    # Slightly perturbed BN affine params (exercises the scale/shift folding).
    gamma = 1.0 + 0.1 * jax.random.normal(kg, (hidden_dim,), jnp.float32)
    beta = 0.1 * jax.random.normal(kbeta, (hidden_dim,), jnp.float32)

    lim2 = 1.0 / jnp.sqrt(hidden_dim)
    w2 = jax.random.uniform(kw2, (hidden_dim, out_dim), jnp.float32, -lim2, lim2)
    b2 = jax.random.uniform(kb2, (out_dim,), jnp.float32, -lim2, lim2)

    ref = predictor_reference(x, w1, b1, gamma, beta, w2, b2)

    # Prepare padded / bf16 weights once, then apply. core_splits=2 exercises
    # the v7x two-TensorCore path (serial 2-step loop on other chips).
    params = prepare_predictor_params(w1, b1, gamma, beta, w2, b2,
                                      block_h=128, core_splits=2)
    out = jax.block_until_ready(predictor_apply(x, params))
    assert out.shape == (B, out_dim)
    # bf16 MXU inputs (f32 accumulation) -> slightly looser tolerance than f32.
    assert jnp.allclose(out, ref, rtol=3e-2, atol=3e-2), \
        float(jnp.max(jnp.abs(out - ref)))

    # Single-split path (default on single-TensorCore chips).
    out1 = jax.block_until_ready(
        predictor_forward(x, w1, b1, gamma, beta, w2, b2,
                          block_h=128, core_splits=1))
    assert out1.shape == (B, out_dim)
    assert jnp.allclose(out1, ref, rtol=3e-2, atol=3e-2), \
        float(jnp.max(jnp.abs(out1 - ref)))

    print("KERNEL_OK")
</pallas_src>

<mosaic_0001>
module attributes {stable_mosaic.version = 11 : i64} {
  func.func @predictor_kernel(%arg0: i32, %arg1: i32, %arg2: memref<16x128xbf16, #tpu.memory_space<vmem>>, %arg3: memref<128x128xbf16, #tpu.memory_space<vmem>>, %arg4: memref<1x128xf32, #tpu.memory_space<vmem>>, %arg5: memref<1x128xf32, #tpu.memory_space<vmem>>, %arg6: memref<128x128xbf16, #tpu.memory_space<vmem>>, %arg7: memref<1x128xf32, #tpu.memory_space<vmem>>, %arg8: memref<1x16x128xf32, #tpu.memory_space<vmem>>) attributes {dimension_semantics = [#tpu.dimension_semantics<parallel>, #tpu.dimension_semantics<arbitrary>], iteration_bounds = array<i64: 2, 1>, scalar_prefetch = 0 : i64, scratch_operands = 0 : i64, tpu.core_type = #tpu.core_type<tc>, window_params = [{pipeline_mode = #tpu.pipeline_mode<synchronous>, transform_indices = @transform_0, window_bounds = array<i64: 16, 128>}, {transform_indices = @transform_1, window_bounds = array<i64: 128, 128>}, {transform_indices = @transform_2, window_bounds = array<i64: 1, 128>}, {transform_indices = @transform_3, window_bounds = array<i64: 1, 128>}, {transform_indices = @transform_4, window_bounds = array<i64: 128, 128>}, {pipeline_mode = #tpu.pipeline_mode<synchronous>, transform_indices = @transform_5, window_bounds = array<i64: 1, 128>}, {pipeline_mode = #tpu.pipeline_mode<synchronous>, transform_indices = @transform_6, window_bounds = array<i64: 1, 16, 128>}]} {
    %c0_i32 = arith.constant 0 : i32
    %0 = arith.cmpi eq, %arg1, %c0_i32 : i32
    %c0_i32_0 = arith.constant 0 : i32
    %1 = arith.cmpi eq, %arg0, %c0_i32_0 : i32
    %2 = arith.andi %0, %1 : i1
    %3 = arith.extui %2 : i1 to i32
    %c0_i32_1 = arith.constant 0 : i32
    %4 = arith.cmpi ne, %3, %c0_i32_1 : i32
    scf.if %4 {
      %c0_29 = arith.constant 0 : index
      %c0_30 = arith.constant 0 : index
      %48 = vector.load %arg7[%c0_29, %c0_30] : memref<1x128xf32, #tpu.memory_space<vmem>>, vector<1x128xf32>
      %49 = vector.shape_cast %48 : vector<1x128xf32> to vector<1x128xf32>
      %50 = vector.broadcast %49 : vector<1x128xf32> to vector<16x128xf32>
      %c0_31 = arith.constant 0 : index
      %c0_32 = arith.constant 0 : index
      %c0_33 = arith.constant 0 : index
      %51 = vector.load %arg8[%c0_31, %c0_32, %c0_33] : memref<1x16x128xf32, #tpu.memory_space<vmem>>, vector<1x16x128xf32>
      %52 = vector.shape_cast %51 : vector<1x16x128xf32> to vector<16x128xf32>
      %53 = vector.shape_cast %50 : vector<16x128xf32> to vector<1x16x128xf32>
      tpu.vector_store %arg8[%c0_31, %c0_32, %c0_33], %53 {strides = array<i32>} : memref<1x16x128xf32, #tpu.memory_space<vmem>>, vector<1x16x128xf32>,
    } else {
    }
    %c0_i32_2 = arith.constant 0 : i32
    %5 = arith.cmpi eq, %arg1, %c0_i32_2 : i32
    %c0_i32_3 = arith.constant 0 : i32
    %6 = arith.cmpi ne, %arg0, %c0_i32_3 : i32
    %7 = arith.andi %5, %6 : i1
    %8 = arith.extui %7 : i1 to i32
    %c0_i32_4 = arith.constant 0 : i32
    %9 = arith.cmpi ne, %8, %c0_i32_4 : i32
    scf.if %9 {
      %cst_29 = arith.constant 0.000000e+00 : f32
      %48 = vector.broadcast %cst_29 : f32 to vector<16x128xf32>
      %c0_30 = arith.constant 0 : index
      %c0_31 = arith.constant 0 : index
      %c0_32 = arith.constant 0 : index
      %49 = vector.load %arg8[%c0_30, %c0_31, %c0_32] : memref<1x16x128xf32, #tpu.memory_space<vmem>>, vector<1x16x128xf32>
      %50 = vector.shape_cast %49 : vector<1x16x128xf32> to vector<16x128xf32>
      %51 = vector.shape_cast %48 : vector<16x128xf32> to vector<1x16x128xf32>
      tpu.vector_store %arg8[%c0_30, %c0_31, %c0_32], %51 {strides = array<i32>} : memref<1x16x128xf32, #tpu.memory_space<vmem>>, vector<1x16x128xf32>,
    } else {
    }
    %c0 = arith.constant 0 : index
    %c0_5 = arith.constant 0 : index
    %10 = vector.load %arg2[%c0, %c0_5] : memref<16x128xbf16, #tpu.memory_space<vmem>>, vector<16x128xbf16>
    %c0_6 = arith.constant 0 : index
    %c0_7 = arith.constant 0 : index
    %11 = vector.load %arg3[%c0_6, %c0_7] : memref<128x128xbf16, #tpu.memory_space<vmem>>, vector<128x128xbf16>
    %cst = arith.constant dense<0.000000e+00> : vector<16x128xf32>
    %12 = tpu.matmul %10, %11, %cst {dimension_numbers = #tpu.dot_dimension_numbers<[1], [0], [0], [1], [0, 0, 1, 1], [], []>} : vector<16x128xbf16>, vector<128x128xbf16>, vector<16x128xf32> -> vector<16x128xf32>
    %cst_8 = arith.constant 1.000000e+00 : f32
    %13 = vector.broadcast %cst_8 : f32 to vector<1x16xf32>
    %cst_9 = arith.constant dense<0.000000e+00> : vector<1x128xf32>
    %14 = tpu.matmul %13, %12, %cst_9 {dimension_numbers = #tpu.dot_dimension_numbers<[1], [0], [0], [1], [0, 0, 1, 1], [], []>, precision = #tpu.contract_precision<fp32>} : vector<1x16xf32>, vector<16x128xf32>, vector<1x128xf32> -> vector<1x128xf32>
    %cst_10 = arith.constant 6.250000e-02 : f32
    %15 = vector.broadcast %cst_10 : f32 to vector<1x128xf32>
    %16 = arith.mulf %14, %15 : vector<1x128xf32>
    %17 = arith.mulf %12, %12 : vector<16x128xf32>
    %cst_11 = arith.constant dense<0.000000e+00> : vector<1x128xf32>
    %18 = tpu.matmul %13, %17, %cst_11 {dimension_numbers = #tpu.dot_dimension_numbers<[1], [0], [0], [1], [0, 0, 1, 1], [], []>, precision = #tpu.contract_precision<fp32>} : vector<1x16xf32>, vector<16x128xf32>, vector<1x128xf32> -> vector<1x128xf32>
    %cst_12 = arith.constant 6.250000e-02 : f32
    %19 = vector.broadcast %cst_12 : f32 to vector<1x128xf32>
    %20 = arith.mulf %18, %19 : vector<1x128xf32>
    %21 = arith.mulf %16, %16 : vector<1x128xf32>
    %22 = arith.subf %20, %21 : vector<1x128xf32>
    %cst_13 = arith.constant 0.000000e+00 : f32
    %23 = vector.broadcast %cst_13 : f32 to vector<1x128xf32>
    %24 = arith.maximumf %22, %23 : vector<1x128xf32>
    %c0_14 = arith.constant 0 : index
    %c0_15 = arith.constant 0 : index
    %25 = vector.load %arg4[%c0_14, %c0_15] : memref<1x128xf32, #tpu.memory_space<vmem>>, vector<1x128xf32>
    %cst_16 = arith.constant 9.99999974E-6 : f32
    %26 = vector.broadcast %cst_16 : f32 to vector<1x128xf32>
    %27 = arith.addf %24, %26 : vector<1x128xf32>
    %28 = math.rsqrt %27 : vector<1x128xf32>
    %29 = arith.mulf %25, %28 : vector<1x128xf32>
    %c0_17 = arith.constant 0 : index
    %c0_18 = arith.constant 0 : index
    %30 = vector.load %arg5[%c0_17, %c0_18] : memref<1x128xf32, #tpu.memory_space<vmem>>, vector<1x128xf32>
    %31 = arith.mulf %29, %16 : vector<1x128xf32>
    %32 = arith.subf %30, %31 : vector<1x128xf32>
    %33 = vector.broadcast %29 : vector<1x128xf32> to vector<16x128xf32>
    %34 = arith.mulf %12, %33 : vector<16x128xf32>
    %35 = vector.broadcast %32 : vector<1x128xf32> to vector<16x128xf32>
    %36 = arith.addf %34, %35 : vector<16x128xf32>
    %cst_19 = arith.constant 0.000000e+00 : f32
    %37 = vector.broadcast %cst_19 : f32 to vector<16x128xf32>
    %38 = arith.maximumf %36, %37 : vector<16x128xf32>
    %c0_20 = arith.constant 0 : index
    %c0_21 = arith.constant 0 : index
    %c0_22 = arith.constant 0 : index
    %39 = vector.load %arg8[%c0_20, %c0_21, %c0_22] : memref<1x16x128xf32, #tpu.memory_space<vmem>>, vector<1x16x128xf32>
    %40 = vector.shape_cast %39 : vector<1x16x128xf32> to vector<16x128xf32>
    %41 = arith.truncf %38 : vector<16x128xf32> to vector<16x128xbf16>
    %c0_23 = arith.constant 0 : index
    %c0_24 = arith.constant 0 : index
    %42 = vector.load %arg6[%c0_23, %c0_24] : memref<128x128xbf16, #tpu.memory_space<vmem>>, vector<128x128xbf16>
    %cst_25 = arith.constant dense<0.000000e+00> : vector<16x128xf32>
    %43 = tpu.matmul %41, %42, %cst_25 {dimension_numbers = #tpu.dot_dimension_numbers<[1], [0], [0], [1], [0, 0, 1, 1], [], []>} : vector<16x128xbf16>, vector<128x128xbf16>, vector<16x128xf32> -> vector<16x128xf32>
    %44 = arith.addf %40, %43 : vector<16x128xf32>
    %c0_26 = arith.constant 0 : index
    %c0_27 = arith.constant 0 : index
    %c0_28 = arith.constant 0 : index
    %45 = vector.load %arg8[%c0_26, %c0_27, %c0_28] : memref<1x16x128xf32, #tpu.memory_space<vmem>>, vector<1x16x128xf32>
    %46 = vector.shape_cast %45 : vector<1x16x128xf32> to vector<16x128xf32>
    %47 = vector.shape_cast %44 : vector<16x128xf32> to vector<1x16x128xf32>
    tpu.vector_store %arg8[%c0_26, %c0_27, %c0_28], %47 {strides = array<i32>} : memref<1x16x128xf32, #tpu.memory_space<vmem>>, vector<1x16x128xf32>,
    return
  }
  func.func @transform_0(%arg0: i32, %arg1: i32) -> (i32, i32) {
    %c0_i32 = arith.constant 0 : i32
    %c0_i32_0 = arith.constant 0 : i32
    %c0_i32_1 = arith.constant 0 : i32
    return %c0_i32, %c0_i32_0 : i32, i32
  }
  func.func @transform_1(%arg0: i32, %arg1: i32) -> (i32, i32) {
    %c1_i32 = arith.constant 1 : i32
    %0 = arith.muli %arg0, %c1_i32 : i32
    %1 = arith.addi %0, %arg1 : i32
    %c0_i32 = arith.constant 0 : i32
    %c0_i32_0 = arith.constant 0 : i32
    return %c0_i32, %1 : i32, i32
  }
  func.func @transform_2(%arg0: i32, %arg1: i32) -> (i32, i32) {
    %c1_i32 = arith.constant 1 : i32
    %0 = arith.muli %arg0, %c1_i32 : i32
    %1 = arith.addi %0, %arg1 : i32
    %c0_i32 = arith.constant 0 : i32
    %c0_i32_0 = arith.constant 0 : i32
    return %c0_i32, %1 : i32, i32
  }
  func.func @transform_3(%arg0: i32, %arg1: i32) -> (i32, i32) {
    %c1_i32 = arith.constant 1 : i32
    %0 = arith.muli %arg0, %c1_i32 : i32
    %1 = arith.addi %0, %arg1 : i32
    %c0_i32 = arith.constant 0 : i32
    %c0_i32_0 = arith.constant 0 : i32
    return %c0_i32, %1 : i32, i32
  }
  func.func @transform_4(%arg0: i32, %arg1: i32) -> (i32, i32) {
    %c1_i32 = arith.constant 1 : i32
    %0 = arith.muli %arg0, %c1_i32 : i32
    %1 = arith.addi %0, %arg1 : i32
    %c0_i32 = arith.constant 0 : i32
    %c0_i32_0 = arith.constant 0 : i32
    return %1, %c0_i32 : i32, i32
  }
  func.func @transform_5(%arg0: i32, %arg1: i32) -> (i32, i32) {
    %c0_i32 = arith.constant 0 : i32
    %c0_i32_0 = arith.constant 0 : i32
    %c0_i32_1 = arith.constant 0 : i32
    return %c0_i32, %c0_i32_0 : i32, i32
  }
  func.func @transform_6(%arg0: i32, %arg1: i32) -> (i32, i32, i32) {
    %c0_i32 = arith.constant 0 : i32
    %c0_i32_0 = arith.constant 0 : i32
    %c0_i32_1 = arith.constant 0 : i32
    return %arg0, %c0_i32, %c0_i32_0 : i32, i32, i32
  }
}

module attributes {stable_mosaic.version = 11 : i64} {
  func.func @predictor_kernel(%arg0: i32, %arg1: i32, %arg2: memref<16x128xbf16, #tpu.memory_space<vmem>>, %arg3: memref<128x128xbf16, #tpu.memory_space<vmem>>, %arg4: memref<1x128xf32, #tpu.memory_space<vmem>>, %arg5: memref<1x128xf32, #tpu.memory_space<vmem>>, %arg6: memref<128x128xbf16, #tpu.memory_space<vmem>>, %arg7: memref<1x128xf32, #tpu.memory_space<vmem>>, %arg8: memref<1x16x128xf32, #tpu.memory_space<vmem>>) attributes {dimension_semantics = [#tpu.dimension_semantics<parallel>, #tpu.dimension_semantics<arbitrary>], iteration_bounds = array<i64: 2, 1>, scalar_prefetch = 0 : i64, scratch_operands = 0 : i64, tpu.core_type = #tpu.core_type<tc>, window_params = [{pipeline_mode = #tpu.pipeline_mode<synchronous>, transform_indices = @transform_0, window_bounds = array<i64: 16, 128>}, {transform_indices = @transform_1, window_bounds = array<i64: 128, 128>}, {transform_indices = @transform_2, window_bounds = array<i64: 1, 128>}, {transform_indices = @transform_3, window_bounds = array<i64: 1, 128>}, {transform_indices = @transform_4, window_bounds = array<i64: 128, 128>}, {pipeline_mode = #tpu.pipeline_mode<synchronous>, transform_indices = @transform_5, window_bounds = array<i64: 1, 128>}, {transform_indices = @transform_6, window_bounds = array<i64: 1, 16, 128>}]} {
    %c0_i32 = arith.constant 0 : i32
    %0 = arith.cmpi eq, %arg1, %c0_i32 : i32
    %c0_i32_0 = arith.constant 0 : i32
    %1 = arith.cmpi eq, %arg0, %c0_i32_0 : i32
    %2 = arith.andi %0, %1 : i1
    %3 = arith.extui %2 : i1 to i32
    %c0_i32_1 = arith.constant 0 : i32
    %4 = arith.cmpi ne, %3, %c0_i32_1 : i32
    scf.if %4 {
      %c0_28 = arith.constant 0 : index
      %c0_29 = arith.constant 0 : index
      %49 = vector.load %arg7[%c0_28, %c0_29] : memref<1x128xf32, #tpu.memory_space<vmem>>, vector<1x128xf32>
      %50 = vector.shape_cast %49 : vector<1x128xf32> to vector<1x128xf32>
      %51 = vector.broadcast %50 : vector<1x128xf32> to vector<16x128xf32>
      %c0_30 = arith.constant 0 : index
      %c0_31 = arith.constant 0 : index
      %c0_32 = arith.constant 0 : index
      %52 = vector.load %arg8[%c0_30, %c0_31, %c0_32] : memref<1x16x128xf32, #tpu.memory_space<vmem>>, vector<1x16x128xf32>
      %53 = vector.shape_cast %52 : vector<1x16x128xf32> to vector<16x128xf32>
      %54 = vector.shape_cast %51 : vector<16x128xf32> to vector<1x16x128xf32>
      tpu.vector_store %arg8[%c0_30, %c0_31, %c0_32], %54 {strides = array<i32>} : memref<1x16x128xf32, #tpu.memory_space<vmem>>, vector<1x16x128xf32>,
    } else {
    }
    %c0_i32_2 = arith.constant 0 : i32
    %5 = arith.cmpi eq, %arg1, %c0_i32_2 : i32
    %c0_i32_3 = arith.constant 0 : i32
    %6 = arith.cmpi ne, %arg0, %c0_i32_3 : i32
    %7 = arith.andi %5, %6 : i1
    %8 = arith.extui %7 : i1 to i32
    %c0_i32_4 = arith.constant 0 : i32
    %9 = arith.cmpi ne, %8, %c0_i32_4 : i32
    scf.if %9 {
      %cst_28 = arith.constant 0.000000e+00 : f32
      %49 = vector.broadcast %cst_28 : f32 to vector<16x128xf32>
      %c0_29 = arith.constant 0 : index
      %c0_30 = arith.constant 0 : index
      %c0_31 = arith.constant 0 : index
      %50 = vector.load %arg8[%c0_29, %c0_30, %c0_31] : memref<1x16x128xf32, #tpu.memory_space<vmem>>, vector<1x16x128xf32>
      %51 = vector.shape_cast %50 : vector<1x16x128xf32> to vector<16x128xf32>
      %52 = vector.shape_cast %49 : vector<16x128xf32> to vector<1x16x128xf32>
      tpu.vector_store %arg8[%c0_29, %c0_30, %c0_31], %52 {strides = array<i32>} : memref<1x16x128xf32, #tpu.memory_space<vmem>>, vector<1x16x128xf32>,
    } else {
    }
    %c0 = arith.constant 0 : index
    %c0_5 = arith.constant 0 : index
    %10 = vector.load %arg2[%c0, %c0_5] : memref<16x128xbf16, #tpu.memory_space<vmem>>, vector<16x128xbf16>
    %c0_6 = arith.constant 0 : index
    %c0_7 = arith.constant 0 : index
    %11 = vector.load %arg3[%c0_6, %c0_7] : memref<128x128xbf16, #tpu.memory_space<vmem>>, vector<128x128xbf16>
    %cst = arith.constant dense<0.000000e+00> : vector<16x128xf32>
    %12 = tpu.matmul %10, %11, %cst {dimension_numbers = #tpu.dot_dimension_numbers<[1], [0], [0], [1], [0, 0, 1, 1], [], []>} : vector<16x128xbf16>, vector<128x128xbf16>, vector<16x128xf32> -> vector<16x128xf32>
    %cst_8 = arith.constant dense<0.000000e+00> : vector<128xf32>
    %13 = vector.multi_reduction <add>, %12, %cst_8 [0] : vector<16x128xf32> to vector<128xf32>
    %14 = vector.shape_cast %13 : vector<128xf32> to vector<1x128xf32>
    %cst_9 = arith.constant 1.600000e+01 : f32
    %15 = vector.broadcast %cst_9 : f32 to vector<1x128xf32>
    %16 = arith.divf %14, %15 : vector<1x128xf32>
    %17 = arith.mulf %12, %12 : vector<16x128xf32>
    %cst_10 = arith.constant dense<0.000000e+00> : vector<128xf32>
    %18 = vector.multi_reduction <add>, %17, %cst_10 [0] : vector<16x128xf32> to vector<128xf32>
    %19 = vector.shape_cast %18 : vector<128xf32> to vector<1x128xf32>
    %cst_11 = arith.constant 1.600000e+01 : f32
    %20 = vector.broadcast %cst_11 : f32 to vector<1x128xf32>
    %21 = arith.divf %19, %20 : vector<1x128xf32>
    %22 = arith.mulf %16, %16 : vector<1x128xf32>
    %23 = arith.subf %21, %22 : vector<1x128xf32>
    %cst_12 = arith.constant 0.000000e+00 : f32
    %24 = vector.broadcast %cst_12 : f32 to vector<1x128xf32>
    %25 = arith.maximumf %23, %24 : vector<1x128xf32>
    %c0_13 = arith.constant 0 : index
    %c0_14 = arith.constant 0 : index
    %26 = vector.load %arg4[%c0_13, %c0_14] : memref<1x128xf32, #tpu.memory_space<vmem>>, vector<1x128xf32>
    %cst_15 = arith.constant 9.99999974E-6 : f32
    %27 = vector.broadcast %cst_15 : f32 to vector<1x128xf32>
    %28 = arith.addf %25, %27 : vector<1x128xf32>
    %29 = math.rsqrt %28 : vector<1x128xf32>
    %30 = arith.mulf %26, %29 : vector<1x128xf32>
    %c0_16 = arith.constant 0 : index
    %c0_17 = arith.constant 0 : index
    %31 = vector.load %arg5[%c0_16, %c0_17] : memref<1x128xf32, #tpu.memory_space<vmem>>, vector<1x128xf32>
    %32 = arith.mulf %30, %16 : vector<1x128xf32>
    %33 = arith.subf %31, %32 : vector<1x128xf32>
    %34 = vector.broadcast %30 : vector<1x128xf32> to vector<16x128xf32>
    %35 = arith.mulf %12, %34 : vector<16x128xf32>
    %36 = vector.broadcast %33 : vector<1x128xf32> to vector<16x128xf32>
    %37 = arith.addf %35, %36 : vector<16x128xf32>
    %cst_18 = arith.constant 0.000000e+00 : f32
    %38 = vector.broadcast %cst_18 : f32 to vector<16x128xf32>
    %39 = arith.maximumf %37, %38 : vector<16x128xf32>
    %c0_19 = arith.constant 0 : index
    %c0_20 = arith.constant 0 : index
    %c0_21 = arith.constant 0 : index
    %40 = vector.load %arg8[%c0_19, %c0_20, %c0_21] : memref<1x16x128xf32, #tpu.memory_space<vmem>>, vector<1x16x128xf32>
    %41 = vector.shape_cast %40 : vector<1x16x128xf32> to vector<16x128xf32>
    %42 = arith.truncf %39 : vector<16x128xf32> to vector<16x128xbf16>
    %c0_22 = arith.constant 0 : index
    %c0_23 = arith.constant 0 : index
    %43 = vector.load %arg6[%c0_22, %c0_23] : memref<128x128xbf16, #tpu.memory_space<vmem>>, vector<128x128xbf16>
    %cst_24 = arith.constant dense<0.000000e+00> : vector<16x128xf32>
    %44 = tpu.matmul %42, %43, %cst_24 {dimension_numbers = #tpu.dot_dimension_numbers<[1], [0], [0], [1], [0, 0, 1, 1], [], []>} : vector<16x128xbf16>, vector<128x128xbf16>, vector<16x128xf32> -> vector<16x128xf32>
    %45 = arith.addf %41, %44 : vector<16x128xf32>
    %c0_25 = arith.constant 0 : index
    %c0_26 = arith.constant 0 : index
    %c0_27 = arith.constant 0 : index
    %46 = vector.load %arg8[%c0_25, %c0_26, %c0_27] : memref<1x16x128xf32, #tpu.memory_space<vmem>>, vector<1x16x128xf32>
    %47 = vector.shape_cast %46 : vector<1x16x128xf32> to vector<16x128xf32>
    %48 = vector.shape_cast %45 : vector<16x128xf32> to vector<1x16x128xf32>
    tpu.vector_store %arg8[%c0_25, %c0_26, %c0_27], %48 {strides = array<i32>} : memref<1x16x128xf32, #tpu.memory_space<vmem>>, vector<1x16x128xf32>,
    return
  }
  func.func @transform_0(%arg0: i32, %arg1: i32) -> (i32, i32) {
    %c0_i32 = arith.constant 0 : i32
    %c0_i32_0 = arith.constant 0 : i32
    %c0_i32_1 = arith.constant 0 : i32
    return %c0_i32, %c0_i32_0 : i32, i32
  }
  func.func @transform_1(%arg0: i32, %arg1: i32) -> (i32, i32) {
    %c1_i32 = arith.constant 1 : i32
    %0 = arith.muli %arg0, %c1_i32 : i32
    %1 = arith.addi %0, %arg1 : i32
    %c0_i32 = arith.constant 0 : i32
    %c0_i32_0 = arith.constant 0 : i32
    return %c0_i32, %1 : i32, i32
  }
  func.func @transform_2(%arg0: i32, %arg1: i32) -> (i32, i32) {
    %c1_i32 = arith.constant 1 : i32
    %0 = arith.muli %arg0, %c1_i32 : i32
    %1 = arith.addi %0, %arg1 : i32
    %c0_i32 = arith.constant 0 : i32
    %c0_i32_0 = arith.constant 0 : i32
    return %c0_i32, %1 : i32, i32
  }
  func.func @transform_3(%arg0: i32, %arg1: i32) -> (i32, i32) {
    %c1_i32 = arith.constant 1 : i32
    %0 = arith.muli %arg0, %c1_i32 : i32
    %1 = arith.addi %0, %arg1 : i32
    %c0_i32 = arith.constant 0 : i32
    %c0_i32_0 = arith.constant 0 : i32
    return %c0_i32, %1 : i32, i32
  }
  func.func @transform_4(%arg0: i32, %arg1: i32) -> (i32, i32) {
    %c1_i32 = arith.constant 1 : i32
    %0 = arith.muli %arg0, %c1_i32 : i32
    %1 = arith.addi %0, %arg1 : i32
    %c0_i32 = arith.constant 0 : i32
    %c0_i32_0 = arith.constant 0 : i32
    return %1, %c0_i32 : i32, i32
  }
  func.func @transform_5(%arg0: i32, %arg1: i32) -> (i32, i32) {
    %c0_i32 = arith.constant 0 : i32
    %c0_i32_0 = arith.constant 0 : i32
    %c0_i32_1 = arith.constant 0 : i32
    return %c0_i32, %c0_i32_0 : i32, i32
  }
  func.func @transform_6(%arg0: i32, %arg1: i32) -> (i32, i32, i32) {
    %c0_i32 = arith.constant 0 : i32
    %c0_i32_0 = arith.constant 0 : i32
    %c0_i32_1 = arith.constant 0 : i32
    return %arg0, %c0_i32, %c0_i32_0 : i32, i32, i32
  }
}

</mosaic_0001>

<llo_original>
// kernel: tpu_custom_call.1
$region0: #{tpu_custom_call.1}
  #allocation0 [shape = 'u32[]', space=smem, size = 0x4, offset = 0x4, fixed_abs, tag = 'smem constant byte address 0x4 - core index']
  #allocation1 [shape = 'u32[144,128]{1,0:T(1,128)}', space=vmem, size = 0x12000, scoped, tag = 'internal scratch']
  %s0 = inlined_call_operand.hbm [shape: bf16[16,128], index: 0, kind: input, shape index: {}]
  %s1 = inlined_call_operand.hbm [shape: bf16[128,256], index: 1, kind: input, shape index: {}]
  %s2 = inlined_call_operand.vmem [shape: f32[1,256], index: 2, kind: input, shape index: {}]
  %s3 = inlined_call_operand.vmem [shape: f32[1,256], index: 3, kind: input, shape index: {}]
  %s4 = inlined_call_operand.hbm [shape: bf16[256,128], index: 4, kind: input, shape index: {}]
  %s5 = inlined_call_operand.vmem [shape: f32[1,128], index: 5, kind: input, shape index: {}]
  %s6 = inlined_call_operand.hbm [shape: f32[2,16,128], index: 6, kind: output, shape index: {}]
  %s7 = sld [smem:[#allocation0]]
  $region77: #{tpu_custom_call.1} parent=0
    _
  %s9 = ssub.s32 1, %s7
  %s10 = scalar_select 0, %s9, %s7
  $region1: #{tpu_custom_call.1} parent=0
    #allocation2 [shape = 'u8[4096]{0}', space=vmem, size = 0x1000, scoped, tag = 'input window, operand 0, single buffered']
    #allocation3 [shape = 's32[2]{0}', space=sflag, size = 0x8, scoped, tag = 'scoped memory for tpu_custom_call.1']
    #allocation4 [shape = 's32[2]{0}', space=sflag, size = 0x8, scoped, tag = 'scoped memory for tpu_custom_call.1']
    #allocation5 [shape = 'u8[65536]{0}', space=vmem, size = 0x10000, scoped, tag = 'input window, operand 1']
    #allocation6 [shape = 's32[2]{0}', space=sflag, size = 0x8, scoped, tag = 'scoped memory for tpu_custom_call.1']
    #allocation7 [shape = 'u8[65536]{0}', space=vmem, size = 0x10000, scoped, tag = 'input window, operand 4']
    #allocation8 [shape = 'u8[8192]{0}', space=vmem, size = 0x2000, scoped, tag = 'output window, operand 0, single buffered']
    %11 = vsyncpa [#allocation3], 0
    %12 = vsyncpa [#allocation6], 0
    %s13 = scalar_lea.sflag [#allocation6], 1
    %14 = vsyncpa %s13, 0
    %15 = vsyncpa [#allocation4], 0
    loop: start=0, step=1, limit=4
    $region2: #{tpu_custom_call.1} parent=1 // loop_pre_header
      _
    $region3: #{tpu_custom_call.1} parent=1 // loop_header
      %s17 = sphi 0, %s21
      %p18 = scmp.ge.s32.totalorder %s17, 4
      %s24 = sphi 0, %s36
      %s25 = sphi 0, %s32
      %s26 = sphi 0, %s24
      %s27 = sphi 0, %s25
      %s28 = sphi 0, %s26
      %s29 = sphi 0, %s27
      %s37 = sphi 0, %s37
      %s39 = sphi 0, %s37
      %s40 = sphi 0, %s39
      %s54 = sphi 0, %s40
      %s62 = sphi 0, %s64
      %s65 = sphi 0, %s62
      %s66 = sphi 0, %s65
      %s82 = sphi 0, %s66
      %s90 = sphi 0, %s92
      %s93 = sphi 0, %s90
      %s94 = sphi 0, %s93
      %s110 = sphi 0, %s94
      %s118 = sphi 0, %s120
      %s121 = sphi 0, %s118
      %s122 = sphi 0, %s121
      %s138 = sphi 0, %s122
      %s146 = sphi 0, %s148
      %s149 = sphi 0, %s146
      %s150 = sphi 0, %s149
      %s166 = sphi 0, %s150
      %s170 = sphi 0, %s170
      %s172 = sphi 0, %s170
      %s173 = sphi 0, %s172
      %s187 = sphi 0, %s173
      %s193 = sphi 0, %s195
      %s196 = sphi 0, %s193
      %s197 = sphi 0, %s196
      %s213 = sphi 0, %s197
    $region4: #{tpu_custom_call.1} parent=1 // loop_header_branch
      %20 = sbr.rel (%p18) target = $region8
    $region5: #{tpu_custom_call.1} parent=1 // loop_body
      %s22 = ssub.s32 %s17, 1
      %s23 = ssub.s32 %s17, 2
      %s30 = sadd.s32 1, %s25
      %p31 = scmp.ge.s32.totalorder %s30, 1
      %s32 = scalar_select %p31, 0, %s30
      %s33 = sadd.s32 1, %s24
      %s34 = scalar_select %p31, %s33, %s24
      %p35 = scmp.ge.s32.totalorder %s34, 2
      %s36 = scalar_select %p35, 0, %s34
      %s38 = sadd.s32 %s37, 1
      %p41 = scmp.eq.s32.totalorder %s17, 1
      %p42 = scmp.ne.s32.totalorder %s37, %s39
      %p43 = scmp.eq.s32.totalorder %s17, 0
      %p44 = por %p42, %p43
      %p45 = scmp.ne.s32.totalorder %s37, %s39
      %p46 = scmp.eq.s32.totalorder %s22, 1
      %p47 = por %p45, %p46
      %p48 = scmp.ne.s32.totalorder %s39, %s40
      %p49 = scmp.eq.s32.totalorder %s22, 0
      %p50 = por %p48, %p49
      %p51 = scmp.ne.s32.totalorder %s39, %s40
      %p52 = scmp.eq.s32.totalorder %s23, 1
      %p53 = por %p51, %p52
      %p55 = scmp.ne.s32.totalorder %s40, %s54
      %p56 = scmp.eq.s32.totalorder %s23, 0
      %p57 = por %p55, %p56
      %s58 = sadd.s32 %s24, %s25
      %s59 = sadd.s32 %s36, %s32
      %s60 = ssub.s32 %s58, %s59
      %p61 = scmp.eq.s32.totalorder %s60, 0
      %s63 = sadd.s32 %s62, 1
      %s64 = scalar_select %p61, %s62, %s63
      %p67 = pneg %p61
      %p68 = scmp.eq.s32.totalorder %s17, 1
      %p69 = por %p67, %p68
      %p70 = scmp.ne.s32.totalorder %s62, %s65
      %p71 = scmp.eq.s32.totalorder %s17, 0
      %p72 = por %p70, %p71
      %p73 = scmp.ne.s32.totalorder %s62, %s65
      %p74 = scmp.eq.s32.totalorder %s22, 1
      %p75 = por %p73, %p74
      %p76 = scmp.ne.s32.totalorder %s65, %s66
      %p77 = scmp.eq.s32.totalorder %s22, 0
      %p78 = por %p76, %p77
      %p79 = scmp.ne.s32.totalorder %s65, %s66
      %p80 = scmp.eq.s32.totalorder %s23, 1
      %p81 = por %p79, %p80
      %p83 = scmp.ne.s32.totalorder %s66, %s82
      %p84 = scmp.eq.s32.totalorder %s23, 0
      %p85 = por %p83, %p84
      %s86 = sadd.s32 %s24, %s25
      %s87 = sadd.s32 %s36, %s32
      %s88 = ssub.s32 %s86, %s87
      %p89 = scmp.eq.s32.totalorder %s88, 0
      %s91 = sadd.s32 %s90, 1
      %s92 = scalar_select %p89, %s90, %s91
      %p95 = pneg %p89
      %p96 = scmp.eq.s32.totalorder %s17, 1
      %p97 = por %p95, %p96
      %p98 = scmp.ne.s32.totalorder %s90, %s93
      %p99 = scmp.eq.s32.totalorder %s17, 0
      %p100 = por %p98, %p99
      %p101 = scmp.ne.s32.totalorder %s90, %s93
      %p102 = scmp.eq.s32.totalorder %s22, 1
      %p103 = por %p101, %p102
      %p104 = scmp.ne.s32.totalorder %s93, %s94
      %p105 = scmp.eq.s32.totalorder %s22, 0
      %p106 = por %p104, %p105
      %p107 = scmp.ne.s32.totalorder %s93, %s94
      %p108 = scmp.eq.s32.totalorder %s23, 1
      %p109 = por %p107, %p108
      %p111 = scmp.ne.s32.totalorder %s94, %s110
      %p112 = scmp.eq.s32.totalorder %s23, 0
      %p113 = por %p111, %p112
      %s114 = sadd.s32 %s24, %s25
      %s115 = sadd.s32 %s36, %s32
      %s116 = ssub.s32 %s114, %s115
      %p117 = scmp.eq.s32.totalorder %s116, 0
      %s119 = sadd.s32 %s118, 1
      %s120 = scalar_select %p117, %s118, %s119
      %p123 = pneg %p117
      %p124 = scmp.eq.s32.totalorder %s17, 1
      %p125 = por %p123, %p124
      %p126 = scmp.ne.s32.totalorder %s118, %s121
      %p127 = scmp.eq.s32.totalorder %s17, 0
      %p128 = por %p126, %p127
      %p129 = scmp.ne.s32.totalorder %s118, %s121
      %p130 = scmp.eq.s32.totalorder %s22, 1
      %p131 = por %p129, %p130
      %p132 = scmp.ne.s32.totalorder %s121, %s122
      %p133 = scmp.eq.s32.totalorder %s22, 0
      %p134 = por %p132, %p133
      %p135 = scmp.ne.s32.totalorder %s121, %s122
      %p136 = scmp.eq.s32.totalorder %s23, 1
      %p137 = por %p135, %p136
      %p139 = scmp.ne.s32.totalorder %s122, %s138
      %p140 = scmp.eq.s32.totalorder %s23, 0
      %p141 = por %p139, %p140
      %s142 = sadd.s32 %s24, %s25
      %s143 = sadd.s32 %s36, %s32
      %s144 = ssub.s32 %s142, %s143
      %p145 = scmp.eq.s32.totalorder %s144, 0
      %s147 = sadd.s32 %s146, 1
      %s148 = scalar_select %p145, %s146, %s147
      %p151 = pneg %p145
      %p152 = scmp.eq.s32.totalorder %s17, 1
      %p153 = por %p151, %p152
      %p154 = scmp.ne.s32.totalorder %s146, %s149
      %p155 = scmp.eq.s32.totalorder %s17, 0
      %p156 = por %p154, %p155
      %p157 = scmp.ne.s32.totalorder %s146, %s149
      %p158 = scmp.eq.s32.totalorder %s22, 1
      %p159 = por %p157, %p158
      %p160 = scmp.ne.s32.totalorder %s149, %s150
      %p161 = scmp.eq.s32.totalorder %s22, 0
      %p162 = por %p160, %p161
      %p163 = scmp.ne.s32.totalorder %s149, %s150
      %p164 = scmp.eq.s32.totalorder %s23, 1
      %p165 = por %p163, %p164
      %p167 = scmp.ne.s32.totalorder %s150, %s166
      %p168 = scmp.eq.s32.totalorder %s23, 0
      %p169 = por %p167, %p168
      %s171 = sadd.s32 %s170, 1
      %p174 = scmp.eq.s32.totalorder %s17, 1
      %p175 = scmp.ne.s32.totalorder %s170, %s172
      %p176 = scmp.eq.s32.totalorder %s17, 0
      %p177 = por %p175, %p176
      %p178 = scmp.ne.s32.totalorder %s170, %s172
      %p179 = scmp.eq.s32.totalorder %s22, 1
      %p180 = por %p178, %p179
      %p181 = scmp.ne.s32.totalorder %s172, %s173
      %p182 = scmp.eq.s32.totalorder %s22, 0
      %p183 = por %p181, %p182
      %p184 = scmp.ne.s32.totalorder %s172, %s173
      %p185 = scmp.eq.s32.totalorder %s23, 1
      %p186 = por %p184, %p185
      %p188 = scmp.ne.s32.totalorder %s173, %s187
      %p189 = scmp.eq.s32.totalorder %s23, 0
      %p190 = por %p188, %p189
      %s191 = ssub.s32 %s24, %s36
      %p192 = scmp.eq.s32.totalorder %s191, 0
      %s194 = sadd.s32 %s193, 1
      %s195 = scalar_select %p192, %s193, %s194
      %p198 = pneg %p192
      %p199 = scmp.eq.s32.totalorder %s17, 1
      %p200 = por %p198, %p199
      %p201 = scmp.ne.s32.totalorder %s193, %s196
      %p202 = scmp.eq.s32.totalorder %s17, 0
      %p203 = por %p201, %p202
      %p204 = scmp.ne.s32.totalorder %s193, %s196
      %p205 = scmp.eq.s32.totalorder %s22, 1
      %p206 = por %p204, %p205
      %p207 = scmp.ne.s32.totalorder %s196, %s197
      %p208 = scmp.eq.s32.totalorder %s22, 0
      %p209 = por %p207, %p208
      %p210 = scmp.ne.s32.totalorder %s196, %s197
      %p211 = scmp.eq.s32.totalorder %s23, 1
      %p212 = por %p210, %p211
      %p214 = scmp.ne.s32.totalorder %s197, %s213
      %p215 = scmp.eq.s32.totalorder %s23, 0
      %p216 = por %p214, %p215
      %p217 = scmp.le.s32.totalorder 1, %s17
      %p218 = scmp.lt.s32.totalorder %s17, 3
      %p219 = pnand %p217, %p218
      %p220 = pneg %p219
      // Predicated region
      $region9: #{tpu_custom_call.1} parent=5 // pred_check
        _
      $region10: #{tpu_custom_call.1} parent=5 // pred_check_branch
        %222 = sbr.rel (%p219) target = $region12
      $region11: #{tpu_custom_call.1} parent=5 // pred_region
        %s223 = ssub.s32 %s17, 1
        // Predicated region
        $region13: #{tpu_custom_call.1} parent=11 // pred_check
          %p224 = pneg %p50
        $region14: #{tpu_custom_call.1} parent=11 // pred_check_branch
          %226 = sbr.rel (%p224) target = $region16
        $region15: #{tpu_custom_call.1} parent=11 // pred_region
          %s228 = ssub.s32 128, 128
          %229 = vsyncadd [#allocation3], %s228
          %s230 = sshll.u32 [#allocation2], 4
          %s231 = int_to_ptr.vmem [resolvable:$true] %s230
          %236 = dma.hbm_to_vmem [thread:$0]  %s0, 128, %s231, [#allocation3], 64, 64, 4
        $region16: #{tpu_custom_call.1} parent=11 // pred_fallthru
          _
        // Predicated region
        $region17: #{tpu_custom_call.1} parent=11 // pred_check
          %p237 = pneg %p183
        $region18: #{tpu_custom_call.1} parent=11 // pred_check_branch
          %239 = sbr.rel (%p237) target = $region20
        $region19: #{tpu_custom_call.1} parent=11 // pred_region
          _
        $region20: #{tpu_custom_call.1} parent=11 // pred_fallthru
          _
      $region12: #{tpu_custom_call.1} parent=5 // pred_fallthru
        _
      %p240 = scmp.lt.s32.totalorder %s17, 2
      // Predicated region
      $region21: #{tpu_custom_call.1} parent=5 // pred_check
        %p241 = pneg %p240
      $region22: #{tpu_custom_call.1} parent=5 // pred_check_branch
        %243 = sbr.rel (%p241) target = $region24
      $region23: #{tpu_custom_call.1} parent=5 // pred_region
        // Predicated region
        $region25: #{tpu_custom_call.1} parent=23 // pred_check
          %p244 = pneg %p72
        $region26: #{tpu_custom_call.1} parent=23 // pred_check_branch
          %246 = sbr.rel (%p244) target = $region28
        $region27: #{tpu_custom_call.1} parent=23 // pred_region
          %s247 = sand.u32 %s17, 1
          %s248 = scalar_lea.sflag [#allocation6], %s247
          %s249 = sand.u32 %s62, 1
          %s250 = smul.addr %s249, 64
          %s251 = scalar_lea.vmem [#allocation5], %s250
          %s252 = sadd.s32 %s24, %s25
          %s254 = ssub.s32 1024, 1024
          %255 = vsyncadd %s248, %s254
          %s256 = smul.addr %s252, 64
          %s257 = scalar_lea.hbm %s1, %s256
          %s258 = sshll.u32 %s251, 4
          %s259 = int_to_ptr.vmem [resolvable:$true] %s258
          %264 = dma.hbm_to_vmem [thread:$0]  %s257, 1024, %s259, %s248, 128, 64, 4
        $region28: #{tpu_custom_call.1} parent=23 // pred_fallthru
          _
        // Predicated region
        $region29: #{tpu_custom_call.1} parent=23 // pred_check
          %p265 = pneg %p100
        $region30: #{tpu_custom_call.1} parent=23 // pred_check_branch
          %267 = sbr.rel (%p265) target = $region32
        $region31: #{tpu_custom_call.1} parent=23 // pred_region
          %s268 = sadd.s32 %s24, %s25
          %p269 = scmp.lt.s32.totalorder %s268, 1
          %s270 = scalar_select %p269, %s268, 1
          %s271 = scalar_lea.vmem %s2, %s270
          %s272 = sadd.s32 %s24, %s25
        $region32: #{tpu_custom_call.1} parent=23 // pred_fallthru
          _
        // Predicated region
        $region33: #{tpu_custom_call.1} parent=23 // pred_check
          %p273 = pneg %p128
        $region34: #{tpu_custom_call.1} parent=23 // pred_check_branch
          %275 = sbr.rel (%p273) target = $region36
        $region35: #{tpu_custom_call.1} parent=23 // pred_region
          %s276 = sadd.s32 %s24, %s25
          %p277 = scmp.lt.s32.totalorder %s276, 1
          %s278 = scalar_select %p277, %s276, 1
          %s279 = scalar_lea.vmem %s3, %s278
          %s280 = sadd.s32 %s24, %s25
        $region36: #{tpu_custom_call.1} parent=23 // pred_fallthru
          _
        // Predicated region
        $region37: #{tpu_custom_call.1} parent=23 // pred_check
          %p281 = pneg %p156
        $region38: #{tpu_custom_call.1} parent=23 // pred_check_branch
          %283 = sbr.rel (%p281) target = $region40
        $region39: #{tpu_custom_call.1} parent=23 // pred_region
          %s284 = sand.u32 %s17, 1
          %s285 = scalar_lea.sflag [#allocation6], %s284
          %s286 = sand.u32 %s146, 1
          %s287 = smul.addr %s286, 64
          %s288 = scalar_lea.vmem [#allocation7], %s287
          %s289 = sadd.s32 %s24, %s25
          %s290 = smul.u32 16, %s289
          %s292 = ssub.s32 1024, 1024
          %293 = vsyncadd %s285, %s292
          %s294 = smul.addr %s290, 64
          %s295 = scalar_lea.hbm %s4, %s294
          %s296 = sshll.u32 %s288, 4
          %s297 = int_to_ptr.vmem [resolvable:$true] %s296
          %302 = dma.hbm_to_vmem [thread:$0]  %s295, 1024, %s297, %s285, 64, 64, 4
        $region40: #{tpu_custom_call.1} parent=23 // pred_fallthru
          _
      $region24: #{tpu_custom_call.1} parent=5 // pred_fallthru
        _
      %p303 = scmp.le.s32.totalorder 1, %s17
      %p304 = scmp.lt.s32.totalorder %s17, 3
      %p305 = pnand %p303, %p304
      %p306 = pneg %p305
      // Predicated region
      $region41: #{tpu_custom_call.1} parent=5 // pred_check
        _
      $region42: #{tpu_custom_call.1} parent=5 // pred_check_branch
        %308 = sbr.rel (%p305) target = $region44
      $region43: #{tpu_custom_call.1} parent=5 // pred_region
        %s309 = ssub.s32 %s17, 1
        // Predicated region
        $region45: #{tpu_custom_call.1} parent=43 // pred_check
          %p310 = pneg %p50
        $region46: #{tpu_custom_call.1} parent=43 // pred_check_branch
          %312 = sbr.rel (%p310) target = $region48
        $region47: #{tpu_custom_call.1} parent=43 // pred_region
          %313 = dma.done [#allocation3], 128
        $region48: #{tpu_custom_call.1} parent=43 // pred_fallthru
          _
        %s314 = sand.u32 %s22, 1
        %s315 = scalar_lea.sflag [#allocation6], %s314
        %s316 = sand.u32 %s65, 1
        %s317 = smul.addr %s316, 64
        %s318 = scalar_lea.vmem [#allocation5], %s317
        // Predicated region
        $region49: #{tpu_custom_call.1} parent=43 // pred_check
          %p319 = pneg %p78
        $region50: #{tpu_custom_call.1} parent=43 // pred_check_branch
          %321 = sbr.rel (%p319) target = $region52
        $region51: #{tpu_custom_call.1} parent=43 // pred_region
          %322 = dma.done %s315, 1024
        $region52: #{tpu_custom_call.1} parent=43 // pred_fallthru
          _
        %s323 = sand.u32 %s22, 1
        %s324 = scalar_lea.sflag [#allocation6], %s323
        %s325 = sand.u32 %s149, 1
        %s326 = smul.addr %s325, 64
        %s327 = scalar_lea.vmem [#allocation7], %s326
        // Predicated region
        $region53: #{tpu_custom_call.1} parent=43 // pred_check
          %p328 = pneg %p162
        $region54: #{tpu_custom_call.1} parent=43 // pred_check_branch
          %330 = sbr.rel (%p328) target = $region56
        $region55: #{tpu_custom_call.1} parent=43 // pred_region
          %331 = dma.done %s324, 1024
        $region56: #{tpu_custom_call.1} parent=43 // pred_fallthru
          _
        %p332 = pneg %p50
        %p333 = pneg %p47
        %s334 = sand.u32 %s22, 1
        %s335 = scalar_lea.sflag [#allocation6], %s334
        %s336 = sand.u32 %s65, 1
        %s337 = smul.addr %s336, 64
        %s338 = scalar_lea.vmem [#allocation5], %s337
        %p339 = pneg %p78
        %p340 = pneg %p75
        %s341 = sadd.s32 %s26, %s27
        %p342 = scmp.lt.s32.totalorder %s341, 1
        %s343 = scalar_select %p342, %s341, 1
        %s344 = scalar_lea.vmem %s2, %s343
        %p345 = pneg %p106
        %p346 = pneg %p103
        %s347 = sadd.s32 %s26, %s27
        %p348 = scmp.lt.s32.totalorder %s347, 1
        %s349 = scalar_select %p348, %s347, 1
        %s350 = scalar_lea.vmem %s3, %s349
        %p351 = pneg %p134
        %p352 = pneg %p131
        %s353 = sand.u32 %s22, 1
        %s354 = scalar_lea.sflag [#allocation6], %s353
        %s355 = sand.u32 %s149, 1
        %s356 = smul.addr %s355, 64
        %s357 = scalar_lea.vmem [#allocation7], %s356
        %p358 = pneg %p162
        %p359 = pneg %p159
        %p360 = pneg %p183
        %p361 = pneg %p180
        %p362 = pneg %p209
        %p363 = pneg %p206
        %s364 = sadd.s32 %s26, %s27
        %s365 = sadd.s32 %s26, %s27
        %p366 = scmp.lt.s32.totalorder %s365, 1
        %s367 = scalar_select %p366, %s365, 1
        %s368 = scalar_lea.vmem %s2, %s367
        %s369 = sadd.s32 %s26, %s27
        %s370 = sadd.s32 %s26, %s27
        %p371 = scmp.lt.s32.totalorder %s370, 1
        %s372 = scalar_select %p371, %s370, 1
        %s373 = scalar_lea.vmem %s3, %s372
        %s374 = sadd.s32 %s26, %s27
        %s375 = sadd.s32 %s26, %s27
        %s376 = smul.u32 16, %s375
        %p378 = scmp.eq.s32.totalorder %s27, 0
        %p379 = scmp.eq.s32.totalorder %s26, 0
        %p380 = pnand %p378, %p379
        %p381 = pneg %p380
        // Predicated region
        $region57: #{tpu_custom_call.1} parent=43 // pred_check
          _
        $region58: #{tpu_custom_call.1} parent=43 // pred_check_branch
          %383 = sbr.rel (%p380) target = $region60
        $region59: #{tpu_custom_call.1} parent=43 // pred_region
          %v384 = vld [vmem:[%s5] sm:$0x1]
          %v386 = vlaneseq
          %v387 = vshrl.u32 %v386, 7
          %v388 = vsub.s32 0, %v387
          %v389 = vrot.slane %v384, %v388
          %391 = vst [vmem:[#allocation8] sm:$0xff] %v389
          %392 = vst [vmem:[#allocation8 + $0x8] sm:$0xff] %v389
        $region60: #{tpu_custom_call.1} parent=43 // pred_fallthru
          _
        %p393 = scmp.ne.s32.totalorder %s26, 0
        %p394 = pnand %p378, %p393
        %p395 = pneg %p394
        // Predicated region
        $region61: #{tpu_custom_call.1} parent=43 // pred_check
          _
        $region62: #{tpu_custom_call.1} parent=43 // pred_check_branch
          %397 = sbr.rel (%p394) target = $region64
        $region63: #{tpu_custom_call.1} parent=43 // pred_region
          %398 = vst [vmem:[#allocation8] sm:$0xff] 0.0
          %399 = vst [vmem:[#allocation8 + $0x8] sm:$0xff] 0.0
        $region64: #{tpu_custom_call.1} parent=43 // pred_fallthru
          _
        %v400 = vld [vmem:[#allocation2] sm:$0xf]
        %v401 = vld [vmem:[#allocation2 + $0x4] sm:$0xf]
        %v402 = vld [vmem:[%s318] sm:$0xf]
        %v403 = vld [vmem:[%s318 + $0x4] sm:$0xf]
        %v404 = vld [vmem:[%s318 + $0x8] sm:$0xf]
        %v405 = vld [vmem:[%s318 + $0xc] sm:$0xf]
        %v406 = vld [vmem:[%s318 + $0x10] sm:$0xf]
        %v407 = vld [vmem:[%s318 + $0x14] sm:$0xf]
        %v408 = vld [vmem:[%s318 + $0x18] sm:$0xf]
        %v409 = vld [vmem:[%s318 + $0x1c] sm:$0xf]
        %v410 = vld [vmem:[%s318 + $0x20] sm:$0xf]
        %v411 = vld [vmem:[%s318 + $0x24] sm:$0xf]
        %v412 = vld [vmem:[%s318 + $0x28] sm:$0xf]
        %v413 = vld [vmem:[%s318 + $0x2c] sm:$0xf]
        %v414 = vld [vmem:[%s318 + $0x30] sm:$0xf]
        %v415 = vld [vmem:[%s318 + $0x34] sm:$0xf]
        %v416 = vld [vmem:[%s318 + $0x38] sm:$0xf]
        %v417 = vld [vmem:[%s318 + $0x3c] sm:$0xf]
        %v420 = vunpack.c.l.b16 %v400
        %v421 = vunpack.c.l.b16 %v401
        %v422 = vpack.c.b16 %v421, %v420
        %v440 = vunpack.c.l.b16 %v402
        %v441 = vunpack.c.l.b16 %v403
        %v442 = vunpack.c.l.b16 %v404
        %v443 = vunpack.c.l.b16 %v405
        %v444 = vunpack.c.l.b16 %v406
        %v445 = vunpack.c.l.b16 %v407
        %v446 = vunpack.c.l.b16 %v408
        %v447 = vunpack.c.l.b16 %v409
        %v448 = vunpack.c.l.b16 %v410
        %v449 = vunpack.c.l.b16 %v411
        %v450 = vunpack.c.l.b16 %v412
        %v451 = vunpack.c.l.b16 %v413
        %v452 = vunpack.c.l.b16 %v414
        %v453 = vunpack.c.l.b16 %v415
        %v454 = vunpack.c.l.b16 %v416
        %v455 = vunpack.c.l.b16 %v417
        %v456 = vpack.c.b16 %v441, %v440
        %v457 = vpack.c.b16 %v443, %v442
        %v458 = vpack.c.b16 %v445, %v444
        %v459 = vpack.c.b16 %v447, %v446
        %v460 = vpack.c.b16 %v449, %v448
        %v461 = vpack.c.b16 %v451, %v450
        %v462 = vpack.c.b16 %v453, %v452
        %v463 = vpack.c.b16 %v455, %v454
        %472 = vmatprep.subr.bf16.mxu0 0
        %473 = vmatpush1.bf16.msra.mxu0 %v463
        %474 = vmatprep.subr.bf16.mxu0 0
        %475 = vmatpush1.bf16.msra.mxu0 %v462
        %476 = vmatprep.subr.bf16.mxu0 0
        %477 = vmatpush1.bf16.msra.mxu0 %v461
        %478 = vmatprep.subr.bf16.mxu0 0
        %479 = vmatpush1.bf16.msra.mxu0 %v460
        %480 = vmatprep.subr.bf16.mxu0 0
        %481 = vmatpush1.bf16.msra.mxu0 %v459
        %482 = vmatprep.subr.bf16.mxu0 0
        %483 = vmatpush1.bf16.msra.mxu0 %v458
        %484 = vmatprep.subr.bf16.mxu0 0
        %485 = vmatpush1.bf16.msra.mxu0 %v457
        %486 = vmatprep.subr.bf16.mxu0 0
        %487 = vmatpush1.bf16.msra.mxu0 %v456
        %488 = vmatprep.subr.bf16.mxu0 0
        %489 = vmatpush2.bf16.msra.mxu0 0
        %490 = vmatprep.subr.bf16.mxu0 0
        %491 = vmatpush2.bf16.msra.mxu0 0
        %492 = vmatprep.subr.bf16.mxu0 0
        %493 = vmatpush2.bf16.msra.mxu0 0
        %494 = vmatprep.subr.bf16.mxu0 0
        %495 = vmatpush2.bf16.msra.mxu0 0
        %496 = vmatprep.subr.bf16.mxu0 0
        %497 = vmatpush2.bf16.msra.mxu0 0
        %498 = vmatprep.subr.bf16.mxu0 0
        %499 = vmatpush2.bf16.msra.mxu0 0
        %500 = vmatprep.subr.bf16.mxu0 0
        %501 = vmatpush2.bf16.msra.mxu0 0
        %502 = vmatprep.subr.bf16.mxu0 0
        %503 = vmatpush2.bf16.msra.mxu0 0
        %504 = vmatprep.mubr.bf16.mxu0 0
        %505 = vmatmul.mubr.bf16.gmra.mxu0 %v422
        %v506 = vpop.f32.mrf.mxu0
        %v507 = vadd.f32 0.0, %v506
        %v508 = vpop.f32.mrf.mxu0
        %v509 = vpop.f32.mrf.mxu0
        %v510 = vadd.f32 0.0, %v509
        %v511 = vpop.f32.mrf.mxu0
        %512 = vdwg.mxu0
        %vm513 = vcmask 130048
        %v515 = vsel %vm513, 1.0, 0
        %517 = vmatprep.subr.mxu0 0.0
        %518 = vmatpush1.msra.mxu0 0.0
        %519 = vmatprep.subr.mxu0 0.0
        %520 = vmatpush1.msra.mxu0 0.0
        %521 = vmatprep.subr.mxu0 0.0
        %522 = vmatpush1.msra.mxu0 0.0
        %523 = vmatprep.subr.mxu0 0.0
        %524 = vmatpush1.msra.mxu0 0.0
        %525 = vmatprep.subr.mxu0 0.0
        %526 = vmatpush1.msra.mxu0 0.0
        %527 = vmatprep.subr.mxu0 0.0
        %528 = vmatpush1.msra.mxu0 0.0
        %529 = vmatprep.subr.mxu0 0.0
        %530 = vmatpush1.msra.mxu0 0.0
        %531 = vmatprep.subr.mxu0 0.0
        %532 = vmatpush1.msra.mxu0 0.0
        %533 = vmatprep.subr.mxu0 0.0
        %534 = vmatpush1.msra.mxu0 0.0
        %535 = vmatprep.subr.mxu0 0.0
        %536 = vmatpush1.msra.mxu0 0.0
        %537 = vmatprep.subr.mxu0 0.0
        %538 = vmatpush1.msra.mxu0 0.0
        %539 = vmatprep.subr.mxu0 0.0
        %540 = vmatpush1.msra.mxu0 0.0
        %541 = vmatprep.subr.mxu0 0.0
        %542 = vmatpush1.msra.mxu0 0.0
        %543 = vmatprep.subr.mxu0 0.0
        %544 = vmatpush1.msra.mxu0 0.0
        %545 = vmatprep.subr.mxu0 0.0
        %v546 = vand.u32 %v510, 4294901760
        %547 = vmatpush1.msra.mxu0 %v546
        %548 = vmatprep.subr.mxu0 0.0
        %v549 = vand.u32 %v507, 4294901760
        %550 = vmatpush1.msra.mxu0 %v549
        %551 = vmatprep.subr.mxu0 0.0
        %552 = vmatpush2.msra.mxu0 0.0
        %553 = vmatprep.subr.mxu0 0.0
        %554 = vmatpush2.msra.mxu0 0.0
        %555 = vmatprep.subr.mxu0 0.0
        %556 = vmatpush2.msra.mxu0 0.0
        %557 = vmatprep.subr.mxu0 0.0
        %558 = vmatpush2.msra.mxu0 0.0
        %559 = vmatprep.subr.mxu0 0.0
        %560 = vmatpush2.msra.mxu0 0.0
        %561 = vmatprep.subr.mxu0 0.0
        %562 = vmatpush2.msra.mxu0 0.0
        %563 = vmatprep.subr.mxu0 0.0
        %564 = vmatpush2.msra.mxu0 0.0
        %565 = vmatprep.subr.mxu0 0.0
        %566 = vmatpush2.msra.mxu0 0.0
        %567 = vmatprep.subr.mxu0 0.0
        %568 = vmatpush2.msra.mxu0 0.0
        %569 = vmatprep.subr.mxu0 0.0
        %570 = vmatpush2.msra.mxu0 0.0
        %571 = vmatprep.subr.mxu0 0.0
        %572 = vmatpush2.msra.mxu0 0.0
        %573 = vmatprep.subr.mxu0 0.0
        %574 = vmatpush2.msra.mxu0 0.0
        %575 = vmatprep.subr.mxu0 0.0
        %576 = vmatpush2.msra.mxu0 0.0
        %577 = vmatprep.subr.mxu0 0.0
        %578 = vmatpush2.msra.mxu0 0.0
        %579 = vmatprep.subr.mxu0 0.0
        %580 = vmatpush2.msra.mxu0 0.0
        %581 = vmatprep.subr.mxu0 0.0
        %582 = vmatpush2.msra.mxu0 0.0
        %583 = vmatprep.mubr.f32.mxu0 0.0
        %v584 = vand.u32 %v515, 4294901760
        %v585 = vsub.f32 %v515, %v584
        %v586 = vand.u32 %v585, 4294901760
        %v587 = vsub.f32 %v585, %v586
        %v588 = vand.u32 %v587, 4294901760
        %589 = vmatmul.mubr.f32.gmra.mxu0 %v588
        %v590 = vpop.f32.mrf.mxu0
        %v591 = vadd.f32 0.0, %v590
        %v592 = vpop.f32.mrf.mxu0
        %593 = vdwg.mxu0
        %594 = vmatprep.subr.mxu0 0.0
        %595 = vmatpush1.msra.mxu0 0.0
        %596 = vmatprep.subr.mxu0 0.0
        %597 = vmatpush1.msra.mxu0 0.0
        %598 = vmatprep.subr.mxu0 0.0
        %599 = vmatpush1.msra.mxu0 0.0
        %600 = vmatprep.subr.mxu0 0.0
        %601 = vmatpush1.msra.mxu0 0.0
        %602 = vmatprep.subr.mxu0 0.0
        %603 = vmatpush1.msra.mxu0 0.0
        %604 = vmatprep.subr.mxu0 0.0
        %605 = vmatpush1.msra.mxu0 0.0
        %606 = vmatprep.subr.mxu0 0.0
        %607 = vmatpush1.msra.mxu0 0.0
        %608 = vmatprep.subr.mxu0 0.0
        %609 = vmatpush1.msra.mxu0 0.0
        %610 = vmatprep.subr.mxu0 0.0
        %611 = vmatpush1.msra.mxu0 0.0
        %612 = vmatprep.subr.mxu0 0.0
        %613 = vmatpush1.msra.mxu0 0.0
        %614 = vmatprep.subr.mxu0 0.0
        %615 = vmatpush1.msra.mxu0 0.0
        %616 = vmatprep.subr.mxu0 0.0
        %617 = vmatpush1.msra.mxu0 0.0
        %618 = vmatprep.subr.mxu0 0.0
        %619 = vmatpush1.msra.mxu0 0.0
        %620 = vmatprep.subr.mxu0 0.0
        %621 = vmatpush1.msra.mxu0 0.0
        %622 = vmatprep.subr.mxu0 0.0
        %v623 = vand.u32 %v510, 4294901760
        %v624 = vsub.f32 %v510, %v623
        %v625 = vand.u32 %v624, 4294901760
        %v626 = vsub.f32 %v624, %v625
        %v627 = vand.u32 %v626, 4294901760
        %628 = vmatpush1.msra.mxu0 %v627
        %629 = vmatprep.subr.mxu0 0.0
        %v630 = vand.u32 %v507, 4294901760
        %v631 = vsub.f32 %v507, %v630
        %v632 = vand.u32 %v631, 4294901760
        %v633 = vsub.f32 %v631, %v632
        %v634 = vand.u32 %v633, 4294901760
        %635 = vmatpush1.msra.mxu0 %v634
        %636 = vmatprep.subr.mxu0 0.0
        %637 = vmatpush2.msra.mxu0 0.0
        %638 = vmatprep.subr.mxu0 0.0
        %639 = vmatpush2.msra.mxu0 0.0
        %640 = vmatprep.subr.mxu0 0.0
        %641 = vmatpush2.msra.mxu0 0.0
        %642 = vmatprep.subr.mxu0 0.0
        %643 = vmatpush2.msra.mxu0 0.0
        %644 = vmatprep.subr.mxu0 0.0
        %645 = vmatpush2.msra.mxu0 0.0
        %646 = vmatprep.subr.mxu0 0.0
        %647 = vmatpush2.msra.mxu0 0.0
        %648 = vmatprep.subr.mxu0 0.0
        %649 = vmatpush2.msra.mxu0 0.0
        %650 = vmatprep.subr.mxu0 0.0
        %651 = vmatpush2.msra.mxu0 0.0
        %652 = vmatprep.subr.mxu0 0.0
        %653 = vmatpush2.msra.mxu0 0.0
        %654 = vmatprep.subr.mxu0 0.0
        %655 = vmatpush2.msra.mxu0 0.0
        %656 = vmatprep.subr.mxu0 0.0
        %657 = vmatpush2.msra.mxu0 0.0
        %658 = vmatprep.subr.mxu0 0.0
        %659 = vmatpush2.msra.mxu0 0.0
        %660 = vmatprep.subr.mxu0 0.0
        %661 = vmatpush2.msra.mxu0 0.0
        %662 = vmatprep.subr.mxu0 0.0
        %663 = vmatpush2.msra.mxu0 0.0
        %664 = vmatprep.subr.mxu0 0.0
        %665 = vmatpush2.msra.mxu0 0.0
        %666 = vmatprep.subr.mxu0 0.0
        %667 = vmatpush2.msra.mxu0 0.0
        %668 = vmatprep.mubr.f32.mxu0 0.0
        %v669 = vand.u32 %v515, 4294901760
        %670 = vmatmul.mubr.f32.gmra.mxu0 %v669
        %v671 = vpop.f32.mrf.mxu0
        %v672 = vadd.f32 %v591, %v671
        %v673 = vpop.f32.mrf.mxu0
        %674 = vdwg.mxu0
        %675 = vmatprep.subr.mxu0 0.0
        %676 = vmatpush1.msra.mxu0 0.0
        %677 = vmatprep.subr.mxu0 0.0
        %678 = vmatpush1.msra.mxu0 0.0
        %679 = vmatprep.subr.mxu0 0.0
        %680 = vmatpush1.msra.mxu0 0.0
        %681 = vmatprep.subr.mxu0 0.0
        %682 = vmatpush1.msra.mxu0 0.0
        %683 = vmatprep.subr.mxu0 0.0
        %684 = vmatpush1.msra.mxu0 0.0
        %685 = vmatprep.subr.mxu0 0.0
        %686 = vmatpush1.msra.mxu0 0.0
        %687 = vmatprep.subr.mxu0 0.0
        %688 = vmatpush1.msra.mxu0 0.0
        %689 = vmatprep.subr.mxu0 0.0
        %690 = vmatpush1.msra.mxu0 0.0
        %691 = vmatprep.subr.mxu0 0.0
        %692 = vmatpush1.msra.mxu0 0.0
        %693 = vmatprep.subr.mxu0 0.0
        %694 = vmatpush1.msra.mxu0 0.0
        %695 = vmatprep.subr.mxu0 0.0
        %696 = vmatpush1.msra.mxu0 0.0
        %697 = vmatprep.subr.mxu0 0.0
        %698 = vmatpush1.msra.mxu0 0.0
        %699 = vmatprep.subr.mxu0 0.0
        %700 = vmatpush1.msra.mxu0 0.0
        %701 = vmatprep.subr.mxu0 0.0
        %702 = vmatpush1.msra.mxu0 0.0
        %703 = vmatprep.subr.mxu0 0.0
        %v704 = vand.u32 %v510, 4294901760
        %v705 = vsub.f32 %v510, %v704
        %706 = vmatpush1.msra.mxu0 %v705
        %707 = vmatprep.subr.mxu0 0.0
        %v708 = vand.u32 %v507, 4294901760
        %v709 = vsub.f32 %v507, %v708
        %710 = vmatpush1.msra.mxu0 %v709
        %711 = vmatprep.subr.mxu0 0.0
        %712 = vmatpush2.msra.mxu0 0.0
        %713 = vmatprep.subr.mxu0 0.0
        %714 = vmatpush2.msra.mxu0 0.0
        %715 = vmatprep.subr.mxu0 0.0
        %716 = vmatpush2.msra.mxu0 0.0
        %717 = vmatprep.subr.mxu0 0.0
        %718 = vmatpush2.msra.mxu0 0.0
        %719 = vmatprep.subr.mxu0 0.0
        %720 = vmatpush2.msra.mxu0 0.0
        %721 = vmatprep.subr.mxu0 0.0
        %722 = vmatpush2.msra.mxu0 0.0
        %723 = vmatprep.subr.mxu0 0.0
        %724 = vmatpush2.msra.mxu0 0.0
        %725 = vmatprep.subr.mxu0 0.0
        %726 = vmatpush2.msra.mxu0 0.0
        %727 = vmatprep.subr.mxu0 0.0
        %728 = vmatpush2.msra.mxu0 0.0
        %729 = vmatprep.subr.mxu0 0.0
        %730 = vmatpush2.msra.mxu0 0.0
        %731 = vmatprep.subr.mxu0 0.0
        %732 = vmatpush2.msra.mxu0 0.0
        %733 = vmatprep.subr.mxu0 0.0
        %734 = vmatpush2.msra.mxu0 0.0
        %735 = vmatprep.subr.mxu0 0.0
        %736 = vmatpush2.msra.mxu0 0.0
        %737 = vmatprep.subr.mxu0 0.0
        %738 = vmatpush2.msra.mxu0 0.0
        %739 = vmatprep.subr.mxu0 0.0
        %740 = vmatpush2.msra.mxu0 0.0
        %741 = vmatprep.subr.mxu0 0.0
        %742 = vmatpush2.msra.mxu0 0.0
        %743 = vmatprep.mubr.f32.mxu0 0.0
        %v744 = vand.u32 %v515, 4294901760
        %v745 = vsub.f32 %v515, %v744
        %746 = vmatmul.mubr.f32.gmra.mxu0 %v745
        %v747 = vpop.f32.mrf.mxu0
        %v748 = vadd.f32 %v672, %v747
        %v749 = vpop.f32.mrf.mxu0
        %750 = vdwg.mxu0
        %751 = vmatprep.subr.mxu0 0.0
        %752 = vmatpush1.msra.mxu0 0.0
        %753 = vmatprep.subr.mxu0 0.0
        %754 = vmatpush1.msra.mxu0 0.0
        %755 = vmatprep.subr.mxu0 0.0
        %756 = vmatpush1.msra.mxu0 0.0
        %757 = vmatprep.subr.mxu0 0.0
        %758 = vmatpush1.msra.mxu0 0.0
        %759 = vmatprep.subr.mxu0 0.0
        %760 = vmatpush1.msra.mxu0 0.0
        %761 = vmatprep.subr.mxu0 0.0
        %762 = vmatpush1.msra.mxu0 0.0
        %763 = vmatprep.subr.mxu0 0.0
        %764 = vmatpush1.msra.mxu0 0.0
        %765 = vmatprep.subr.mxu0 0.0
        %766 = vmatpush1.msra.mxu0 0.0
        %767 = vmatprep.subr.mxu0 0.0
        %768 = vmatpush1.msra.mxu0 0.0
        %769 = vmatprep.subr.mxu0 0.0
        %770 = vmatpush1.msra.mxu0 0.0
        %771 = vmatprep.subr.mxu0 0.0
        %772 = vmatpush1.msra.mxu0 0.0
        %773 = vmatprep.subr.mxu0 0.0
        %774 = vmatpush1.msra.mxu0 0.0
        %775 = vmatprep.subr.mxu0 0.0
        %776 = vmatpush1.msra.mxu0 0.0
        %777 = vmatprep.subr.mxu0 0.0
        %778 = vmatpush1.msra.mxu0 0.0
        %779 = vmatprep.subr.mxu0 0.0
        %v780 = vand.u32 %v510, 4294901760
        %781 = vmatpush1.msra.mxu0 %v780
        %782 = vmatprep.subr.mxu0 0.0
        %v783 = vand.u32 %v507, 4294901760
        %784 = vmatpush1.msra.mxu0 %v783
        %785 = vmatprep.subr.mxu0 0.0
        %786 = vmatpush2.msra.mxu0 0.0
        %787 = vmatprep.subr.mxu0 0.0
        %788 = vmatpush2.msra.mxu0 0.0
        %789 = vmatprep.subr.mxu0 0.0
        %790 = vmatpush2.msra.mxu0 0.0
        %791 = vmatprep.subr.mxu0 0.0
        %792 = vmatpush2.msra.mxu0 0.0
        %793 = vmatprep.subr.mxu0 0.0
        %794 = vmatpush2.msra.mxu0 0.0
        %795 = vmatprep.subr.mxu0 0.0
        %796 = vmatpush2.msra.mxu0 0.0
        %797 = vmatprep.subr.mxu0 0.0
        %798 = vmatpush2.msra.mxu0 0.0
        %799 = vmatprep.subr.mxu0 0.0
        %800 = vmatpush2.msra.mxu0 0.0
        %801 = vmatprep.subr.mxu0 0.0
        %802 = vmatpush2.msra.mxu0 0.0
        %803 = vmatprep.subr.mxu0 0.0
        %804 = vmatpush2.msra.mxu0 0.0
        %805 = vmatprep.subr.mxu0 0.0
        %806 = vmatpush2.msra.mxu0 0.0
        %807 = vmatprep.subr.mxu0 0.0
        %808 = vmatpush2.msra.mxu0 0.0
        %809 = vmatprep.subr.mxu0 0.0
        %810 = vmatpush2.msra.mxu0 0.0
        %811 = vmatprep.subr.mxu0 0.0
        %812 = vmatpush2.msra.mxu0 0.0
        %813 = vmatprep.subr.mxu0 0.0
        %814 = vmatpush2.msra.mxu0 0.0
        %815 = vmatprep.subr.mxu0 0.0
        %816 = vmatpush2.msra.mxu0 0.0
        %817 = vmatprep.mubr.f32.mxu0 0.0
        %v818 = vand.u32 %v515, 4294901760
        %v819 = vsub.f32 %v515, %v818
        %v820 = vand.u32 %v819, 4294901760
        %821 = vmatmul.mubr.f32.gmra.mxu0 %v820
        %v822 = vpop.f32.mrf.mxu0
        %v823 = vadd.f32 %v748, %v822
        %v824 = vpop.f32.mrf.mxu0
        %825 = vdwg.mxu0
        %826 = vmatprep.subr.mxu0 0.0
        %827 = vmatpush1.msra.mxu0 0.0
        %828 = vmatprep.subr.mxu0 0.0
        %829 = vmatpush1.msra.mxu0 0.0
        %830 = vmatprep.subr.mxu0 0.0
        %831 = vmatpush1.msra.mxu0 0.0
        %832 = vmatprep.subr.mxu0 0.0
        %833 = vmatpush1.msra.mxu0 0.0
        %834 = vmatprep.subr.mxu0 0.0
        %835 = vmatpush1.msra.mxu0 0.0
        %836 = vmatprep.subr.mxu0 0.0
        %837 = vmatpush1.msra.mxu0 0.0
        %838 = vmatprep.subr.mxu0 0.0
        %839 = vmatpush1.msra.mxu0 0.0
        %840 = vmatprep.subr.mxu0 0.0
        %841 = vmatpush1.msra.mxu0 0.0
        %842 = vmatprep.subr.mxu0 0.0
        %843 = vmatpush1.msra.mxu0 0.0
        %844 = vmatprep.subr.mxu0 0.0
        %845 = vmatpush1.msra.mxu0 0.0
        %846 = vmatprep.subr.mxu0 0.0
        %847 = vmatpush1.msra.mxu0 0.0
        %848 = vmatprep.subr.mxu0 0.0
        %849 = vmatpush1.msra.mxu0 0.0
        %850 = vmatprep.subr.mxu0 0.0
        %851 = vmatpush1.msra.mxu0 0.0
        %852 = vmatprep.subr.mxu0 0.0
        %853 = vmatpush1.msra.mxu0 0.0
        %854 = vmatprep.subr.mxu0 0.0
        %v855 = vand.u32 %v510, 4294901760
        %v856 = vsub.f32 %v510, %v855
        %v857 = vand.u32 %v856, 4294901760
        %858 = vmatpush1.msra.mxu0 %v857
        %859 = vmatprep.subr.mxu0 0.0
        %v860 = vand.u32 %v507, 4294901760
        %v861 = vsub.f32 %v507, %v860
        %v862 = vand.u32 %v861, 4294901760
        %863 = vmatpush1.msra.mxu0 %v862
        %864 = vmatprep.subr.mxu0 0.0
        %865 = vmatpush2.msra.mxu0 0.0
        %866 = vmatprep.subr.mxu0 0.0
        %867 = vmatpush2.msra.mxu0 0.0
        %868 = vmatprep.subr.mxu0 0.0
        %869 = vmatpush2.msra.mxu0 0.0
        %870 = vmatprep.subr.mxu0 0.0
        %871 = vmatpush2.msra.mxu0 0.0
        %872 = vmatprep.subr.mxu0 0.0
        %873 = vmatpush2.msra.mxu0 0.0
        %874 = vmatprep.subr.mxu0 0.0
        %875 = vmatpush2.msra.mxu0 0.0
        %876 = vmatprep.subr.mxu0 0.0
        %877 = vmatpush2.msra.mxu0 0.0
        %878 = vmatprep.subr.mxu0 0.0
        %879 = vmatpush2.msra.mxu0 0.0
        %880 = vmatprep.subr.mxu0 0.0
        %881 = vmatpush2.msra.mxu0 0.0
        %882 = vmatprep.subr.mxu0 0.0
        %883 = vmatpush2.msra.mxu0 0.0
        %884 = vmatprep.subr.mxu0 0.0
        %885 = vmatpush2.msra.mxu0 0.0
        %886 = vmatprep.subr.mxu0 0.0
        %887 = vmatpush2.msra.mxu0 0.0
        %888 = vmatprep.subr.mxu0 0.0
        %889 = vmatpush2.msra.mxu0 0.0
        %890 = vmatprep.subr.mxu0 0.0
        %891 = vmatpush2.msra.mxu0 0.0
        %892 = vmatprep.subr.mxu0 0.0
        %893 = vmatpush2.msra.mxu0 0.0
        %894 = vmatprep.subr.mxu0 0.0
        %895 = vmatpush2.msra.mxu0 0.0
        %896 = vmatprep.mubr.f32.mxu0 0.0
        %v897 = vand.u32 %v515, 4294901760
        %898 = vmatmul.mubr.f32.gmra.mxu0 %v897
        %v899 = vpop.f32.mrf.mxu0
        %v900 = vadd.f32 %v823, %v899
        %v901 = vpop.f32.mrf.mxu0
        %902 = vdwg.mxu0
        %903 = vmatprep.subr.mxu0 0.0
        %904 = vmatpush1.msra.mxu0 0.0
        %905 = vmatprep.subr.mxu0 0.0
        %906 = vmatpush1.msra.mxu0 0.0
        %907 = vmatprep.subr.mxu0 0.0
        %908 = vmatpush1.msra.mxu0 0.0
        %909 = vmatprep.subr.mxu0 0.0
        %910 = vmatpush1.msra.mxu0 0.0
        %911 = vmatprep.subr.mxu0 0.0
        %912 = vmatpush1.msra.mxu0 0.0
        %913 = vmatprep.subr.mxu0 0.0
        %914 = vmatpush1.msra.mxu0 0.0
        %915 = vmatprep.subr.mxu0 0.0
        %916 = vmatpush1.msra.mxu0 0.0
        %917 = vmatprep.subr.mxu0 0.0
        %918 = vmatpush1.msra.mxu0 0.0
        %919 = vmatprep.subr.mxu0 0.0
        %920 = vmatpush1.msra.mxu0 0.0
        %921 = vmatprep.subr.mxu0 0.0
        %922 = vmatpush1.msra.mxu0 0.0
        %923 = vmatprep.subr.mxu0 0.0
        %924 = vmatpush1.msra.mxu0 0.0
        %925 = vmatprep.subr.mxu0 0.0
        %926 = vmatpush1.msra.mxu0 0.0
        %927 = vmatprep.subr.mxu0 0.0
        %928 = vmatpush1.msra.mxu0 0.0
        %929 = vmatprep.subr.mxu0 0.0
        %930 = vmatpush1.msra.mxu0 0.0
        %931 = vmatprep.subr.mxu0 0.0
        %v932 = vand.u32 %v510, 4294901760
        %933 = vmatpush1.msra.mxu0 %v932
        %934 = vmatprep.subr.mxu0 0.0
        %v935 = vand.u32 %v507, 4294901760
        %936 = vmatpush1.msra.mxu0 %v935
        %937 = vmatprep.subr.mxu0 0.0
        %938 = vmatpush2.msra.mxu0 0.0
        %939 = vmatprep.subr.mxu0 0.0
        %940 = vmatpush2.msra.mxu0 0.0
        %941 = vmatprep.subr.mxu0 0.0
        %942 = vmatpush2.msra.mxu0 0.0
        %943 = vmatprep.subr.mxu0 0.0
        %944 = vmatpush2.msra.mxu0 0.0
        %945 = vmatprep.subr.mxu0 0.0
        %946 = vmatpush2.msra.mxu0 0.0
        %947 = vmatprep.subr.mxu0 0.0
        %948 = vmatpush2.msra.mxu0 0.0
        %949 = vmatprep.subr.mxu0 0.0
        %950 = vmatpush2.msra.mxu0 0.0
        %951 = vmatprep.subr.mxu0 0.0
        %952 = vmatpush2.msra.mxu0 0.0
        %953 = vmatprep.subr.mxu0 0.0
        %954 = vmatpush2.msra.mxu0 0.0
        %955 = vmatprep.subr.mxu0 0.0
        %956 = vmatpush2.msra.mxu0 0.0
        %957 = vmatprep.subr.mxu0 0.0
        %958 = vmatpush2.msra.mxu0 0.0
        %959 = vmatprep.subr.mxu0 0.0
        %960 = vmatpush2.msra.mxu0 0.0
        %961 = vmatprep.subr.mxu0 0.0
        %962 = vmatpush2.msra.mxu0 0.0
        %963 = vmatprep.subr.mxu0 0.0
        %964 = vmatpush2.msra.mxu0 0.0
        %965 = vmatprep.subr.mxu0 0.0
        %966 = vmatpush2.msra.mxu0 0.0
        %967 = vmatprep.subr.mxu0 0.0
        %968 = vmatpush2.msra.mxu0 0.0
        %969 = vmatprep.mubr.f32.mxu0 0.0
        %v970 = vand.u32 %v515, 4294901760
        %971 = vmatmul.mubr.f32.gmra.mxu0 %v970
        %v972 = vpop.f32.mrf.mxu0
        %v973 = vadd.f32 %v900, %v972
        %v974 = vpop.f32.mrf.mxu0
        %975 = vdwg.mxu0
        %v976 = vmul.f32 %v973, 0.0625
        %v977 = vmul.f32 %v507, %v507
        %v978 = vmul.f32 %v510, %v510
        %979 = vmatprep.subr.mxu0 0.0
        %980 = vmatpush1.msra.mxu0 0.0
        %981 = vmatprep.subr.mxu0 0.0
        %982 = vmatpush1.msra.mxu0 0.0
        %983 = vmatprep.subr.mxu0 0.0
        %984 = vmatpush1.msra.mxu0 0.0
        %985 = vmatprep.subr.mxu0 0.0
        %986 = vmatpush1.msra.mxu0 0.0
        %987 = vmatprep.subr.mxu0 0.0
        %988 = vmatpush1.msra.mxu0 0.0
        %989 = vmatprep.subr.mxu0 0.0
        %990 = vmatpush1.msra.mxu0 0.0
        %991 = vmatprep.subr.mxu0 0.0
        %992 = vmatpush1.msra.mxu0 0.0
        %993 = vmatprep.subr.mxu0 0.0
        %994 = vmatpush1.msra.mxu0 0.0
        %995 = vmatprep.subr.mxu0 0.0
        %996 = vmatpush1.msra.mxu0 0.0
        %997 = vmatprep.subr.mxu0 0.0
        %998 = vmatpush1.msra.mxu0 0.0
        %999 = vmatprep.subr.mxu0 0.0
        %1000 = vmatpush1.msra.mxu0 0.0
        %1001 = vmatprep.subr.mxu0 0.0
        %1002 = vmatpush1.msra.mxu0 0.0
        %1003 = vmatprep.subr.mxu0 0.0
        %1004 = vmatpush1.msra.mxu0 0.0
        %1005 = vmatprep.subr.mxu0 0.0
        %1006 = vmatpush1.msra.mxu0 0.0
        %1007 = vmatprep.subr.mxu0 0.0
        %v1008 = vand.u32 %v978, 4294901760
        %1009 = vmatpush1.msra.mxu0 %v1008
        %1010 = vmatprep.subr.mxu0 0.0
        %v1011 = vand.u32 %v977, 4294901760
        %1012 = vmatpush1.msra.mxu0 %v1011
        %1013 = vmatprep.subr.mxu0 0.0
        %1014 = vmatpush2.msra.mxu0 0.0
        %1015 = vmatprep.subr.mxu0 0.0
        %1016 = vmatpush2.msra.mxu0 0.0
        %1017 = vmatprep.subr.mxu0 0.0
        %1018 = vmatpush2.msra.mxu0 0.0
        %1019 = vmatprep.subr.mxu0 0.0
        %1020 = vmatpush2.msra.mxu0 0.0
        %1021 = vmatprep.subr.mxu0 0.0
        %1022 = vmatpush2.msra.mxu0 0.0
        %1023 = vmatprep.subr.mxu0 0.0
        %1024 = vmatpush2.msra.mxu0 0.0
        %1025 = vmatprep.subr.mxu0 0.0
        %1026 = vmatpush2.msra.mxu0 0.0
        %1027 = vmatprep.subr.mxu0 0.0
        %1028 = vmatpush2.msra.mxu0 0.0
        %1029 = vmatprep.subr.mxu0 0.0
        %1030 = vmatpush2.msra.mxu0 0.0
        %1031 = vmatprep.subr.mxu0 0.0
        %1032 = vmatpush2.msra.mxu0 0.0
        %1033 = vmatprep.subr.mxu0 0.0
        %1034 = vmatpush2.msra.mxu0 0.0
        %1035 = vmatprep.subr.mxu0 0.0
        %1036 = vmatpush2.msra.mxu0 0.0
        %1037 = vmatprep.subr.mxu0 0.0
        %1038 = vmatpush2.msra.mxu0 0.0
        %1039 = vmatprep.subr.mxu0 0.0
        %1040 = vmatpush2.msra.mxu0 0.0
        %1041 = vmatprep.subr.mxu0 0.0
        %1042 = vmatpush2.msra.mxu0 0.0
        %1043 = vmatprep.subr.mxu0 0.0
        %1044 = vmatpush2.msra.mxu0 0.0
        %1045 = vmatprep.mubr.f32.mxu0 0.0
        %v1046 = vand.u32 %v515, 4294901760
        %v1047 = vsub.f32 %v515, %v1046
        %v1048 = vand.u32 %v1047, 4294901760
        %v1049 = vsub.f32 %v1047, %v1048
        %v1050 = vand.u32 %v1049, 4294901760
        %1051 = vmatmul.mubr.f32.gmra.mxu0 %v1050
        %v1052 = vpop.f32.mrf.mxu0
        %v1053 = vadd.f32 0.0, %v1052
        %v1054 = vpop.f32.mrf.mxu0
        %1055 = vdwg.mxu0
        %1056 = vmatprep.subr.mxu0 0.0
        %1057 = vmatpush1.msra.mxu0 0.0
        %1058 = vmatprep.subr.mxu0 0.0
        %1059 = vmatpush1.msra.mxu0 0.0
        %1060 = vmatprep.subr.mxu0 0.0
        %1061 = vmatpush1.msra.mxu0 0.0
        %1062 = vmatprep.subr.mxu0 0.0
        %1063 = vmatpush1.msra.mxu0 0.0
        %1064 = vmatprep.subr.mxu0 0.0
        %1065 = vmatpush1.msra.mxu0 0.0
        %1066 = vmatprep.subr.mxu0 0.0
        %1067 = vmatpush1.msra.mxu0 0.0
        %1068 = vmatprep.subr.mxu0 0.0
        %1069 = vmatpush1.msra.mxu0 0.0
        %1070 = vmatprep.subr.mxu0 0.0
        %1071 = vmatpush1.msra.mxu0 0.0
        %1072 = vmatprep.subr.mxu0 0.0
        %1073 = vmatpush1.msra.mxu0 0.0
        %1074 = vmatprep.subr.mxu0 0.0
        %1075 = vmatpush1.msra.mxu0 0.0
        %1076 = vmatprep.subr.mxu0 0.0
        %1077 = vmatpush1.msra.mxu0 0.0
        %1078 = vmatprep.subr.mxu0 0.0
        %1079 = vmatpush1.msra.mxu0 0.0
        %1080 = vmatprep.subr.mxu0 0.0
        %1081 = vmatpush1.msra.mxu0 0.0
        %1082 = vmatprep.subr.mxu0 0.0
        %1083 = vmatpush1.msra.mxu0 0.0
        %1084 = vmatprep.subr.mxu0 0.0
        %v1085 = vand.u32 %v978, 4294901760
        %v1086 = vsub.f32 %v978, %v1085
        %v1087 = vand.u32 %v1086, 4294901760
        %v1088 = vsub.f32 %v1086, %v1087
        %v1089 = vand.u32 %v1088, 4294901760
        %1090 = vmatpush1.msra.mxu0 %v1089
        %1091 = vmatprep.subr.mxu0 0.0
        %v1092 = vand.u32 %v977, 4294901760
        %v1093 = vsub.f32 %v977, %v1092
        %v1094 = vand.u32 %v1093, 4294901760
        %v1095 = vsub.f32 %v1093, %v1094
        %v1096 = vand.u32 %v1095, 4294901760
        %1097 = vmatpush1.msra.mxu0 %v1096
        %1098 = vmatprep.subr.mxu0 0.0
        %1099 = vmatpush2.msra.mxu0 0.0
        %1100 = vmatprep.subr.mxu0 0.0
        %1101 = vmatpush2.msra.mxu0 0.0
        %1102 = vmatprep.subr.mxu0 0.0
        %1103 = vmatpush2.msra.mxu0 0.0
        %1104 = vmatprep.subr.mxu0 0.0
        %1105 = vmatpush2.msra.mxu0 0.0
        %1106 = vmatprep.subr.mxu0 0.0
        %1107 = vmatpush2.msra.mxu0 0.0
        %1108 = vmatprep.subr.mxu0 0.0
        %1109 = vmatpush2.msra.mxu0 0.0
        %1110 = vmatprep.subr.mxu0 0.0
        %1111 = vmatpush2.msra.mxu0 0.0
        %1112 = vmatprep.subr.mxu0 0.0
        %1113 = vmatpush2.msra.mxu0 0.0
        %1114 = vmatprep.subr.mxu0 0.0
        %1115 = vmatpush2.msra.mxu0 0.0
        %1116 = vmatprep.subr.mxu0 0.0
        %1117 = vmatpush2.msra.mxu0 0.0
        %1118 = vmatprep.subr.mxu0 0.0
        %1119 = vmatpush2.msra.mxu0 0.0
        %1120 = vmatprep.subr.mxu0 0.0
        %1121 = vmatpush2.msra.mxu0 0.0
        %1122 = vmatprep.subr.mxu0 0.0
        %1123 = vmatpush2.msra.mxu0 0.0
        %1124 = vmatprep.subr.mxu0 0.0
        %1125 = vmatpush2.msra.mxu0 0.0
        %1126 = vmatprep.subr.mxu0 0.0
        %1127 = vmatpush2.msra.mxu0 0.0
        %1128 = vmatprep.subr.mxu0 0.0
        %1129 = vmatpush2.msra.mxu0 0.0
        %1130 = vmatprep.mubr.f32.mxu0 0.0
        %v1131 = vand.u32 %v515, 4294901760
        %1132 = vmatmul.mubr.f32.gmra.mxu0 %v1131
        %v1133 = vpop.f32.mrf.mxu0
        %v1134 = vadd.f32 %v1053, %v1133
        %v1135 = vpop.f32.mrf.mxu0
        %1136 = vdwg.mxu0
        %1137 = vmatprep.subr.mxu0 0.0
        %1138 = vmatpush1.msra.mxu0 0.0
        %1139 = vmatprep.subr.mxu0 0.0
        %1140 = vmatpush1.msra.mxu0 0.0
        %1141 = vmatprep.subr.mxu0 0.0
        %1142 = vmatpush1.msra.mxu0 0.0
        %1143 = vmatprep.subr.mxu0 0.0
        %1144 = vmatpush1.msra.mxu0 0.0
        %1145 = vmatprep.subr.mxu0 0.0
        %1146 = vmatpush1.msra.mxu0 0.0
        %1147 = vmatprep.subr.mxu0 0.0
        %1148 = vmatpush1.msra.mxu0 0.0
        %1149 = vmatprep.subr.mxu0 0.0
        %1150 = vmatpush1.msra.mxu0 0.0
        %1151 = vmatprep.subr.mxu0 0.0
        %1152 = vmatpush1.msra.mxu0 0.0
        %1153 = vmatprep.subr.mxu0 0.0
        %1154 = vmatpush1.msra.mxu0 0.0
        %1155 = vmatprep.subr.mxu0 0.0
        %1156 = vmatpush1.msra.mxu0 0.0
        %1157 = vmatprep.subr.mxu0 0.0
        %1158 = vmatpush1.msra.mxu0 0.0
        %1159 = vmatprep.subr.mxu0 0.0
        %1160 = vmatpush1.msra.mxu0 0.0
        %1161 = vmatprep.subr.mxu0 0.0
        %1162 = vmatpush1.msra.mxu0 0.0
        %1163 = vmatprep.subr.mxu0 0.0
        %1164 = vmatpush1.msra.mxu0 0.0
        %1165 = vmatprep.subr.mxu0 0.0
        %v1166 = vand.u32 %v978, 4294901760
        %v1167 = vsub.f32 %v978, %v1166
        %1168 = vmatpush1.msra.mxu0 %v1167
        %1169 = vmatprep.subr.mxu0 0.0
        %v1170 = vand.u32 %v977, 4294901760
        %v1171 = vsub.f32 %v977, %v1170
        %1172 = vmatpush1.msra.mxu0 %v1171
        %1173 = vmatprep.subr.mxu0 0.0
        %1174 = vmatpush2.msra.mxu0 0.0
        %1175 = vmatprep.subr.mxu0 0.0
        %1176 = vmatpush2.msra.mxu0 0.0
        %1177 = vmatprep.subr.mxu0 0.0
        %1178 = vmatpush2.msra.mxu0 0.0
        %1179 = vmatprep.subr.mxu0 0.0
        %1180 = vmatpush2.msra.mxu0 0.0
        %1181 = vmatprep.subr.mxu0 0.0
        %1182 = vmatpush2.msra.mxu0 0.0
        %1183 = vmatprep.subr.mxu0 0.0
        %1184 = vmatpush2.msra.mxu0 0.0
        %1185 = vmatprep.subr.mxu0 0.0
        %1186 = vmatpush2.msra.mxu0 0.0
        %1187 = vmatprep.subr.mxu0 0.0
        %1188 = vmatpush2.msra.mxu0 0.0
        %1189 = vmatprep.subr.mxu0 0.0
        %1190 = vmatpush2.msra.mxu0 0.0
        %1191 = vmatprep.subr.mxu0 0.0
        %1192 = vmatpush2.msra.mxu0 0.0
        %1193 = vmatprep.subr.mxu0 0.0
        %1194 = vmatpush2.msra.mxu0 0.0
        %1195 = vmatprep.subr.mxu0 0.0
        %1196 = vmatpush2.msra.mxu0 0.0
        %1197 = vmatprep.subr.mxu0 0.0
        %1198 = vmatpush2.msra.mxu0 0.0
        %1199 = vmatprep.subr.mxu0 0.0
        %1200 = vmatpush2.msra.mxu0 0.0
        %1201 = vmatprep.subr.mxu0 0.0
        %1202 = vmatpush2.msra.mxu0 0.0
        %1203 = vmatprep.subr.mxu0 0.0
        %1204 = vmatpush2.msra.mxu0 0.0
        %1205 = vmatprep.mubr.f32.mxu0 0.0
        %v1206 = vand.u32 %v515, 4294901760
        %v1207 = vsub.f32 %v515, %v1206
        %1208 = vmatmul.mubr.f32.gmra.mxu0 %v1207
        %v1209 = vpop.f32.mrf.mxu0
        %v1210 = vadd.f32 %v1134, %v1209
        %v1211 = vpop.f32.mrf.mxu0
        %1212 = vdwg.mxu0
        %1213 = vmatprep.subr.mxu0 0.0
        %1214 = vmatpush1.msra.mxu0 0.0
        %1215 = vmatprep.subr.mxu0 0.0
        %1216 = vmatpush1.msra.mxu0 0.0
        %1217 = vmatprep.subr.mxu0 0.0
        %1218 = vmatpush1.msra.mxu0 0.0
        %1219 = vmatprep.subr.mxu0 0.0
        %1220 = vmatpush1.msra.mxu0 0.0
        %1221 = vmatprep.subr.mxu0 0.0
        %1222 = vmatpush1.msra.mxu0 0.0
        %1223 = vmatprep.subr.mxu0 0.0
        %1224 = vmatpush1.msra.mxu0 0.0
        %1225 = vmatprep.subr.mxu0 0.0
        %1226 = vmatpush1.msra.mxu0 0.0
        %1227 = vmatprep.subr.mxu0 0.0
        %1228 = vmatpush1.msra.mxu0 0.0
        %1229 = vmatprep.subr.mxu0 0.0
        %1230 = vmatpush1.msra.mxu0 0.0
        %1231 = vmatprep.subr.mxu0 0.0
        %1232 = vmatpush1.msra.mxu0 0.0
        %1233 = vmatprep.subr.mxu0 0.0
        %1234 = vmatpush1.msra.mxu0 0.0
        %1235 = vmatprep.subr.mxu0 0.0
        %1236 = vmatpush1.msra.mxu0 0.0
        %1237 = vmatprep.subr.mxu0 0.0
        %1238 = vmatpush1.msra.mxu0 0.0
        %1239 = vmatprep.subr.mxu0 0.0
        %1240 = vmatpush1.msra.mxu0 0.0
        %1241 = vmatprep.subr.mxu0 0.0
        %v1242 = vand.u32 %v978, 4294901760
        %1243 = vmatpush1.msra.mxu0 %v1242
        %1244 = vmatprep.subr.mxu0 0.0
        %v1245 = vand.u32 %v977, 4294901760
        %1246 = vmatpush1.msra.mxu0 %v1245
        %1247 = vmatprep.subr.mxu0 0.0
        %1248 = vmatpush2.msra.mxu0 0.0
        %1249 = vmatprep.subr.mxu0 0.0
        %1250 = vmatpush2.msra.mxu0 0.0
        %1251 = vmatprep.subr.mxu0 0.0
        %1252 = vmatpush2.msra.mxu0 0.0
        %1253 = vmatprep.subr.mxu0 0.0
        %1254 = vmatpush2.msra.mxu0 0.0
        %1255 = vmatprep.subr.mxu0 0.0
        %1256 = vmatpush2.msra.mxu0 0.0
        %1257 = vmatprep.subr.mxu0 0.0
        %1258 = vmatpush2.msra.mxu0 0.0
        %1259 = vmatprep.subr.mxu0 0.0
        %1260 = vmatpush2.msra.mxu0 0.0
        %1261 = vmatprep.subr.mxu0 0.0
        %1262 = vmatpush2.msra.mxu0 0.0
        %1263 = vmatprep.subr.mxu0 0.0
        %1264 = vmatpush2.msra.mxu0 0.0
        %1265 = vmatprep.subr.mxu0 0.0
        %1266 = vmatpush2.msra.mxu0 0.0
        %1267 = vmatprep.subr.mxu0 0.0
        %1268 = vmatpush2.msra.mxu0 0.0
        %1269 = vmatprep.subr.mxu0 0.0
        %1270 = vmatpush2.msra.mxu0 0.0
        %1271 = vmatprep.subr.mxu0 0.0
        %1272 = vmatpush2.msra.mxu0 0.0
        %1273 = vmatprep.subr.mxu0 0.0
        %1274 = vmatpush2.msra.mxu0 0.0
        %1275 = vmatprep.subr.mxu0 0.0
        %1276 = vmatpush2.msra.mxu0 0.0
        %1277 = vmatprep.subr.mxu0 0.0
        %1278 = vmatpush2.msra.mxu0 0.0
        %1279 = vmatprep.mubr.f32.mxu0 0.0
        %v1280 = vand.u32 %v515, 4294901760
        %v1281 = vsub.f32 %v515, %v1280
        %v1282 = vand.u32 %v1281, 4294901760
        %1283 = vmatmul.mubr.f32.gmra.mxu0 %v1282
        %v1284 = vpop.f32.mrf.mxu0
        %v1285 = vadd.f32 %v1210, %v1284
        %v1286 = vpop.f32.mrf.mxu0
        %1287 = vdwg.mxu0
        %1288 = vmatprep.subr.mxu0 0.0
        %1289 = vmatpush1.msra.mxu0 0.0
        %1290 = vmatprep.subr.mxu0 0.0
        %1291 = vmatpush1.msra.mxu0 0.0
        %1292 = vmatprep.subr.mxu0 0.0
        %1293 = vmatpush1.msra.mxu0 0.0
        %1294 = vmatprep.subr.mxu0 0.0
        %1295 = vmatpush1.msra.mxu0 0.0
        %1296 = vmatprep.subr.mxu0 0.0
        %1297 = vmatpush1.msra.mxu0 0.0
        %1298 = vmatprep.subr.mxu0 0.0
        %1299 = vmatpush1.msra.mxu0 0.0
        %1300 = vmatprep.subr.mxu0 0.0
        %1301 = vmatpush1.msra.mxu0 0.0
        %1302 = vmatprep.subr.mxu0 0.0
        %1303 = vmatpush1.msra.mxu0 0.0
        %1304 = vmatprep.subr.mxu0 0.0
        %1305 = vmatpush1.msra.mxu0 0.0
        %1306 = vmatprep.subr.mxu0 0.0
        %1307 = vmatpush1.msra.mxu0 0.0
        %1308 = vmatprep.subr.mxu0 0.0
        %1309 = vmatpush1.msra.mxu0 0.0
        %1310 = vmatprep.subr.mxu0 0.0
        %1311 = vmatpush1.msra.mxu0 0.0
        %1312 = vmatprep.subr.mxu0 0.0
        %1313 = vmatpush1.msra.mxu0 0.0
        %1314 = vmatprep.subr.mxu0 0.0
        %1315 = vmatpush1.msra.mxu0 0.0
        %1316 = vmatprep.subr.mxu0 0.0
        %v1317 = vand.u32 %v978, 4294901760
        %v1318 = vsub.f32 %v978, %v1317
        %v1319 = vand.u32 %v1318, 4294901760
        %1320 = vmatpush1.msra.mxu0 %v1319
        %1321 = vmatprep.subr.mxu0 0.0
        %v1322 = vand.u32 %v977, 4294901760
        %v1323 = vsub.f32 %v977, %v1322
        %v1324 = vand.u32 %v1323, 4294901760
        %1325 = vmatpush1.msra.mxu0 %v1324
        %1326 = vmatprep.subr.mxu0 0.0
        %1327 = vmatpush2.msra.mxu0 0.0
        %1328 = vmatprep.subr.mxu0 0.0
        %1329 = vmatpush2.msra.mxu0 0.0
        %1330 = vmatprep.subr.mxu0 0.0
        %1331 = vmatpush2.msra.mxu0 0.0
        %1332 = vmatprep.subr.mxu0 0.0
        %1333 = vmatpush2.msra.mxu0 0.0
        %1334 = vmatprep.subr.mxu0 0.0
        %1335 = vmatpush2.msra.mxu0 0.0
        %1336 = vmatprep.subr.mxu0 0.0
        %1337 = vmatpush2.msra.mxu0 0.0
        %1338 = vmatprep.subr.mxu0 0.0
        %1339 = vmatpush2.msra.mxu0 0.0
        %1340 = vmatprep.subr.mxu0 0.0
        %1341 = vmatpush2.msra.mxu0 0.0
        %1342 = vmatprep.subr.mxu0 0.0
        %1343 = vmatpush2.msra.mxu0 0.0
        %1344 = vmatprep.subr.mxu0 0.0
        %1345 = vmatpush2.msra.mxu0 0.0
        %1346 = vmatprep.subr.mxu0 0.0
        %1347 = vmatpush2.msra.mxu0 0.0
        %1348 = vmatprep.subr.mxu0 0.0
        %1349 = vmatpush2.msra.mxu0 0.0
        %1350 = vmatprep.subr.mxu0 0.0
        %1351 = vmatpush2.msra.mxu0 0.0
        %1352 = vmatprep.subr.mxu0 0.0
        %1353 = vmatpush2.msra.mxu0 0.0
        %1354 = vmatprep.subr.mxu0 0.0
        %1355 = vmatpush2.msra.mxu0 0.0
        %1356 = vmatprep.subr.mxu0 0.0
        %1357 = vmatpush2.msra.mxu0 0.0
        %1358 = vmatprep.mubr.f32.mxu0 0.0
        %v1359 = vand.u32 %v515, 4294901760
        %1360 = vmatmul.mubr.f32.gmra.mxu0 %v1359
        %v1361 = vpop.f32.mrf.mxu0
        %v1362 = vadd.f32 %v1285, %v1361
        %v1363 = vpop.f32.mrf.mxu0
        %1364 = vdwg.mxu0
        %1365 = vmatprep.subr.mxu0 0.0
        %1366 = vmatpush1.msra.mxu0 0.0
        %1367 = vmatprep.subr.mxu0 0.0
        %1368 = vmatpush1.msra.mxu0 0.0
        %1369 = vmatprep.subr.mxu0 0.0
        %1370 = vmatpush1.msra.mxu0 0.0
        %1371 = vmatprep.subr.mxu0 0.0
        %1372 = vmatpush1.msra.mxu0 0.0
        %1373 = vmatprep.subr.mxu0 0.0
        %1374 = vmatpush1.msra.mxu0 0.0
        %1375 = vmatprep.subr.mxu0 0.0
        %1376 = vmatpush1.msra.mxu0 0.0
        %1377 = vmatprep.subr.mxu0 0.0
        %1378 = vmatpush1.msra.mxu0 0.0
        %1379 = vmatprep.subr.mxu0 0.0
        %1380 = vmatpush1.msra.mxu0 0.0
        %1381 = vmatprep.subr.mxu0 0.0
        %1382 = vmatpush1.msra.mxu0 0.0
        %1383 = vmatprep.subr.mxu0 0.0
        %1384 = vmatpush1.msra.mxu0 0.0
        %1385 = vmatprep.subr.mxu0 0.0
        %1386 = vmatpush1.msra.mxu0 0.0
        %1387 = vmatprep.subr.mxu0 0.0
        %1388 = vmatpush1.msra.mxu0 0.0
        %1389 = vmatprep.subr.mxu0 0.0
        %1390 = vmatpush1.msra.mxu0 0.0
        %1391 = vmatprep.subr.mxu0 0.0
        %1392 = vmatpush1.msra.mxu0 0.0
        %1393 = vmatprep.subr.mxu0 0.0
        %v1394 = vand.u32 %v978, 4294901760
        %1395 = vmatpush1.msra.mxu0 %v1394
        %1396 = vmatprep.subr.mxu0 0.0
        %v1397 = vand.u32 %v977, 4294901760
        %1398 = vmatpush1.msra.mxu0 %v1397
        %1399 = vmatprep.subr.mxu0 0.0
        %1400 = vmatpush2.msra.mxu0 0.0
        %1401 = vmatprep.subr.mxu0 0.0
        %1402 = vmatpush2.msra.mxu0 0.0
        %1403 = vmatprep.subr.mxu0 0.0
        %1404 = vmatpush2.msra.mxu0 0.0
        %1405 = vmatprep.subr.mxu0 0.0
        %1406 = vmatpush2.msra.mxu0 0.0
        %1407 = vmatprep.subr.mxu0 0.0
        %1408 = vmatpush2.msra.mxu0 0.0
        %1409 = vmatprep.subr.mxu0 0.0
        %1410 = vmatpush2.msra.mxu0 0.0
        %1411 = vmatprep.subr.mxu0 0.0
        %1412 = vmatpush2.msra.mxu0 0.0
        %1413 = vmatprep.subr.mxu0 0.0
        %1414 = vmatpush2.msra.mxu0 0.0
        %1415 = vmatprep.subr.mxu0 0.0
        %1416 = vmatpush2.msra.mxu0 0.0
        %1417 = vmatprep.subr.mxu0 0.0
        %1418 = vmatpush2.msra.mxu0 0.0
        %1419 = vmatprep.subr.mxu0 0.0
        %1420 = vmatpush2.msra.mxu0 0.0
        %1421 = vmatprep.subr.mxu0 0.0
        %1422 = vmatpush2.msra.mxu0 0.0
        %1423 = vmatprep.subr.mxu0 0.0
        %1424 = vmatpush2.msra.mxu0 0.0
        %1425 = vmatprep.subr.mxu0 0.0
        %1426 = vmatpush2.msra.mxu0 0.0
        %1427 = vmatprep.subr.mxu0 0.0
        %1428 = vmatpush2.msra.mxu0 0.0
        %1429 = vmatprep.subr.mxu0 0.0
        %1430 = vmatpush2.msra.mxu0 0.0
        %1431 = vmatprep.mubr.f32.mxu0 0.0
        %v1432 = vand.u32 %v515, 4294901760
        %1433 = vmatmul.mubr.f32.gmra.mxu0 %v1432
        %v1434 = vpop.f32.mrf.mxu0
        %v1435 = vadd.f32 %v1362, %v1434
        %v1436 = vpop.f32.mrf.mxu0
        %1437 = vdwg.mxu0
        %v1438 = vmul.f32 %v1435, 0.0625
        %v1439 = vmul.f32 %v976, %v976
        %v1440 = vsub.f32 %v1438, %v1439
        %v1441 = vmax.f32 %v1440, 0.0
        %v1442 = vld [vmem:[%s368] sm:$0x1]
        %v1443 = vadd.f32 %v1441, 1e-05
        %v1444 = vrsqrt.pop %v1443
        %v1445 = vmul.f32 %v1442, %v1444
        %v1446 = vld [vmem:[%s373] sm:$0x1]
        %v1447 = vmul.f32 %v1445, %v976
        %v1448 = vsub.f32 %v1446, %v1447
        %v1450 = vlaneseq
        %v1451 = vshrl.u32 %v1450, 7
        %v1452 = vsub.s32 0, %v1451
        %v1453 = vrot.slane %v1445, %v1452
        %v1455 = vmul.f32 %v507, %v1453
        %v1456 = vmul.f32 %v510, %v1453
        %v1458 = vlaneseq
        %v1459 = vshrl.u32 %v1458, 7
        %v1460 = vsub.s32 0, %v1459
        %v1461 = vrot.slane %v1448, %v1460
        %v1463 = vadd.f32 %v1455, %v1461
        %v1464 = vadd.f32 %v1456, %v1461
        %v1465 = vmax.f32 %v1463, 0.0
        %v1466 = vmax.f32 %v1464, 0.0
        %v1467 = vld [vmem:[#allocation8] sm:$0xff]
        %v1468 = vld [vmem:[#allocation8 + $0x8] sm:$0xff]
        %v1469 = vpack.c.bf16 %v1466, %v1465
        %v1470 = vld [vmem:[%s327] sm:$0xf]
        %v1471 = vld [vmem:[%s327 + $0x4] sm:$0xf]
        %v1472 = vld [vmem:[%s327 + $0x8] sm:$0xf]
        %v1473 = vld [vmem:[%s327 + $0xc] sm:$0xf]
        %v1474 = vld [vmem:[%s327 + $0x10] sm:$0xf]
        %v1475 = vld [vmem:[%s327 + $0x14] sm:$0xf]
        %v1476 = vld [vmem:[%s327 + $0x18] sm:$0xf]
        %v1477 = vld [vmem:[%s327 + $0x1c] sm:$0xf]
        %v1478 = vld [vmem:[%s327 + $0x20] sm:$0xf]
        %v1479 = vld [vmem:[%s327 + $0x24] sm:$0xf]
        %v1480 = vld [vmem:[%s327 + $0x28] sm:$0xf]
        %v1481 = vld [vmem:[%s327 + $0x2c] sm:$0xf]
        %v1482 = vld [vmem:[%s327 + $0x30] sm:$0xf]
        %v1483 = vld [vmem:[%s327 + $0x34] sm:$0xf]
        %v1484 = vld [vmem:[%s327 + $0x38] sm:$0xf]
        %v1485 = vld [vmem:[%s327 + $0x3c] sm:$0xf]
        %v1502 = vunpack.c.l.b16 %v1470
        %v1503 = vunpack.c.l.b16 %v1471
        %v1504 = vunpack.c.l.b16 %v1472
        %v1505 = vunpack.c.l.b16 %v1473
        %v1506 = vunpack.c.l.b16 %v1474
        %v1507 = vunpack.c.l.b16 %v1475
        %v1508 = vunpack.c.l.b16 %v1476
        %v1509 = vunpack.c.l.b16 %v1477
        %v1510 = vunpack.c.l.b16 %v1478
        %v1511 = vunpack.c.l.b16 %v1479
        %v1512 = vunpack.c.l.b16 %v1480
        %v1513 = vunpack.c.l.b16 %v1481
        %v1514 = vunpack.c.l.b16 %v1482
        %v1515 = vunpack.c.l.b16 %v1483
        %v1516 = vunpack.c.l.b16 %v1484
        %v1517 = vunpack.c.l.b16 %v1485
        %v1518 = vpack.c.b16 %v1503, %v1502
        %v1519 = vpack.c.b16 %v1505, %v1504
        %v1520 = vpack.c.b16 %v1507, %v1506
        %v1521 = vpack.c.b16 %v1509, %v1508
        %v1522 = vpack.c.b16 %v1511, %v1510
        %v1523 = vpack.c.b16 %v1513, %v1512
        %v1524 = vpack.c.b16 %v1515, %v1514
        %v1525 = vpack.c.b16 %v1517, %v1516
        %1534 = vmatprep.subr.bf16.mxu0 0
        %1535 = vmatpush1.bf16.msra.mxu0 %v1525
        %1536 = vmatprep.subr.bf16.mxu0 0
        %1537 = vmatpush1.bf16.msra.mxu0 %v1524
        %1538 = vmatprep.subr.bf16.mxu0 0
        %1539 = vmatpush1.bf16.msra.mxu0 %v1523
        %1540 = vmatprep.subr.bf16.mxu0 0
        %1541 = vmatpush1.bf16.msra.mxu0 %v1522
        %1542 = vmatprep.subr.bf16.mxu0 0
        %1543 = vmatpush1.bf16.msra.mxu0 %v1521
        %1544 = vmatprep.subr.bf16.mxu0 0
        %1545 = vmatpush1.bf16.msra.mxu0 %v1520
        %1546 = vmatprep.subr.bf16.mxu0 0
        %1547 = vmatpush1.bf16.msra.mxu0 %v1519
        %1548 = vmatprep.subr.bf16.mxu0 0
        %1549 = vmatpush1.bf16.msra.mxu0 %v1518
        %1550 = vmatprep.subr.bf16.mxu0 0
        %1551 = vmatpush2.bf16.msra.mxu0 0
        %1552 = vmatprep.subr.bf16.mxu0 0
        %1553 = vmatpush2.bf16.msra.mxu0 0
        %1554 = vmatprep.subr.bf16.mxu0 0
        %1555 = vmatpush2.bf16.msra.mxu0 0
        %1556 = vmatprep.subr.bf16.mxu0 0
        %1557 = vmatpush2.bf16.msra.mxu0 0
        %1558 = vmatprep.subr.bf16.mxu0 0
        %1559 = vmatpush2.bf16.msra.mxu0 0
        %1560 = vmatprep.subr.bf16.mxu0 0
        %1561 = vmatpush2.bf16.msra.mxu0 0
        %1562 = vmatprep.subr.bf16.mxu0 0
        %1563 = vmatpush2.bf16.msra.mxu0 0
        %1564 = vmatprep.subr.bf16.mxu0 0
        %1565 = vmatpush2.bf16.msra.mxu0 0
        %1566 = vmatprep.mubr.bf16.mxu0 0
        %1567 = vmatmul.mubr.bf16.gmra.mxu0 %v1469
        %v1568 = vpop.f32.mrf.mxu0
        %v1569 = vadd.f32 0.0, %v1568
        %v1570 = vpop.f32.mrf.mxu0
        %v1571 = vpop.f32.mrf.mxu0
        %v1572 = vadd.f32 0.0, %v1571
        %v1573 = vpop.f32.mrf.mxu0
        %1574 = vdwg.mxu0
        %v1575 = vadd.f32 %v1467, %v1569
        %v1576 = vadd.f32 %v1468, %v1572
        %1577 = vst [vmem:[#allocation8] sm:$0xff] %v1575
        %1578 = vst [vmem:[#allocation8 + $0x8] sm:$0xff] %v1576
        // Predicated region
        $region65: #{tpu_custom_call.1} parent=43 // pred_check
          %p1579 = pneg %p206
        $region66: #{tpu_custom_call.1} parent=43 // pred_check_branch
          %1581 = sbr.rel (%p1579) target = $region68
        $region67: #{tpu_custom_call.1} parent=43 // pred_region
          %s1583 = ssub.s32 256, 256
          %1584 = vsyncadd [#allocation4], %s1583
          %s1585 = smul.addr %s26, 2
          %s1586 = smul.addr %s1585, 128
          %s1587 = scalar_lea.hbm %s6, %s1586
          %s1588 = sshll.u32 [#allocation8], 4
          %s1589 = int_to_ptr.vmem [resolvable:$true] %s1588
          %1594 = dma.vmem_to_hbm [thread:$0]  %s1589, 256, %s1587, [#allocation4], 128, 128, 8
        $region68: #{tpu_custom_call.1} parent=43 // pred_fallthru
          _
        // Predicated region
        $region69: #{tpu_custom_call.1} parent=43 // pred_check
          %p1595 = pneg %p206
        $region70: #{tpu_custom_call.1} parent=43 // pred_check_branch
          %1597 = sbr.rel (%p1595) target = $region72
        $region71: #{tpu_custom_call.1} parent=43 // pred_region
          %1598 = dma.done [#allocation4], 256
        $region72: #{tpu_custom_call.1} parent=43 // pred_fallthru
          _
      $region44: #{tpu_custom_call.1} parent=5 // pred_fallthru
        _
      %p1599 = scmp.le.s32.totalorder 2, %s17
      // Predicated region
      $region73: #{tpu_custom_call.1} parent=5 // pred_check
        %p1600 = pneg %p1599
      $region74: #{tpu_custom_call.1} parent=5 // pred_check_branch
        %1602 = sbr.rel (%p1600) target = $region76
      $region75: #{tpu_custom_call.1} parent=5 // pred_region
        %s1603 = ssub.s32 %s17, 2
      $region76: #{tpu_custom_call.1} parent=5 // pred_fallthru
        _
    $region6: #{tpu_custom_call.1} parent=1 // loop_footer
      %s21 = sadd.s32 1, %s17
    $region7: #{tpu_custom_call.1} parent=1 // loop_footer_branch
      %16 = sbr.rel target = $region3
    $region8: #{tpu_custom_call.1} parent=1 // loop_exit
      _
    %1604 = vsyncpa [#allocation3], 1
    %s1605 = scalar_lea.sflag [#allocation3], 1
    %1606 = vsyncpa %s1605, 1
    %1607 = vsyncpa [#allocation6], 1
    %s1608 = scalar_lea.sflag [#allocation6], 1
    %1609 = vsyncpa %s1608, 1
    %1610 = vsyncpa [#allocation4], 1
    %s1611 = scalar_lea.sflag [#allocation4], 1
    %1612 = vsyncpa %s1611, 1

// kernel: tpu_custom_call.1
$region0: #{tpu_custom_call.1}
  #allocation0 [shape = 'u32[]', space=smem, size = 0x4, offset = 0x4, fixed_abs, tag = 'smem constant byte address 0x4 - core index']
  #allocation1 [shape = 'u32[144,128]{1,0:T(1,128)}', space=vmem, size = 0x12000, scoped, tag = 'internal scratch']
  %s0 = inlined_call_operand.hbm [shape: bf16[16,128], index: 0, kind: input, shape index: {}]
  %s1 = inlined_call_operand.hbm [shape: bf16[128,256], index: 1, kind: input, shape index: {}]
  %s2 = inlined_call_operand.vmem [shape: f32[1,256], index: 2, kind: input, shape index: {}]
  %s3 = inlined_call_operand.vmem [shape: f32[1,256], index: 3, kind: input, shape index: {}]
  %s4 = inlined_call_operand.hbm [shape: bf16[256,128], index: 4, kind: input, shape index: {}]
  %s5 = inlined_call_operand.vmem [shape: f32[1,128], index: 5, kind: input, shape index: {}]
  %s6 = inlined_call_operand.hbm [shape: f32[2,16,128], index: 6, kind: output, shape index: {}]
  %s7 = sld [smem:[#allocation0]]
  $region77: #{tpu_custom_call.1} parent=0
    _
  %s9 = ssub.s32 1, %s7
  %s10 = scalar_select 0, %s9, %s7
  $region1: #{tpu_custom_call.1} parent=0
    #allocation2 [shape = 'u8[4096]{0}', space=vmem, size = 0x1000, scoped, tag = 'input window, operand 0, single buffered']
    #allocation3 [shape = 's32[2]{0}', space=sflag, size = 0x8, scoped, tag = 'scoped memory for tpu_custom_call.1']
    #allocation4 [shape = 's32[2]{0}', space=sflag, size = 0x8, scoped, tag = 'scoped memory for tpu_custom_call.1']
    #allocation5 [shape = 'u8[65536]{0}', space=vmem, size = 0x10000, scoped, tag = 'input window, operand 1']
    #allocation6 [shape = 's32[2]{0}', space=sflag, size = 0x8, scoped, tag = 'scoped memory for tpu_custom_call.1']
    #allocation7 [shape = 'u8[65536]{0}', space=vmem, size = 0x10000, scoped, tag = 'input window, operand 4']
    #allocation8 [shape = 'u8[16384]{0}', space=vmem, size = 0x4000, scoped, tag = 'output window, operand 0']
    %11 = vsyncpa [#allocation3], 0
    %12 = vsyncpa [#allocation6], 0
    %s13 = scalar_lea.sflag [#allocation6], 1
    %14 = vsyncpa %s13, 0
    %15 = vsyncpa [#allocation4], 0
    %s16 = scalar_lea.sflag [#allocation4], 1
    %17 = vsyncpa %s16, 0
    loop: start=0, step=1, limit=4
    $region2: #{tpu_custom_call.1} parent=1 // loop_pre_header
      _
    $region3: #{tpu_custom_call.1} parent=1 // loop_header
      %s19 = sphi 0, %s23
      %p20 = scmp.ge.s32.totalorder %s19, 4
      %s26 = sphi 0, %s38
      %s27 = sphi 0, %s34
      %s28 = sphi 0, %s26
      %s29 = sphi 0, %s27
      %s30 = sphi 0, %s28
      %s31 = sphi 0, %s29
      %s39 = sphi 0, %s39
      %s41 = sphi 0, %s39
      %s42 = sphi 0, %s41
      %s56 = sphi 0, %s42
      %s64 = sphi 0, %s66
      %s67 = sphi 0, %s64
      %s68 = sphi 0, %s67
      %s84 = sphi 0, %s68
      %s92 = sphi 0, %s94
      %s95 = sphi 0, %s92
      %s96 = sphi 0, %s95
      %s112 = sphi 0, %s96
      %s120 = sphi 0, %s122
      %s123 = sphi 0, %s120
      %s124 = sphi 0, %s123
      %s140 = sphi 0, %s124
      %s148 = sphi 0, %s150
      %s151 = sphi 0, %s148
      %s152 = sphi 0, %s151
      %s168 = sphi 0, %s152
      %s172 = sphi 0, %s172
      %s174 = sphi 0, %s172
      %s175 = sphi 0, %s174
      %s189 = sphi 0, %s175
      %s195 = sphi 0, %s197
      %s198 = sphi 0, %s195
      %s199 = sphi 0, %s198
      %s215 = sphi 0, %s199
    $region4: #{tpu_custom_call.1} parent=1 // loop_header_branch
      %22 = sbr.rel (%p20) target = $region8
    $region5: #{tpu_custom_call.1} parent=1 // loop_body
      %s24 = ssub.s32 %s19, 1
      %s25 = ssub.s32 %s19, 2
      %s32 = sadd.s32 1, %s27
      %p33 = scmp.ge.s32.totalorder %s32, 1
      %s34 = scalar_select %p33, 0, %s32
      %s35 = sadd.s32 1, %s26
      %s36 = scalar_select %p33, %s35, %s26
      %p37 = scmp.ge.s32.totalorder %s36, 2
      %s38 = scalar_select %p37, 0, %s36
      %s40 = sadd.s32 %s39, 1
      %p43 = scmp.eq.s32.totalorder %s19, 1
      %p44 = scmp.ne.s32.totalorder %s39, %s41
      %p45 = scmp.eq.s32.totalorder %s19, 0
      %p46 = por %p44, %p45
      %p47 = scmp.ne.s32.totalorder %s39, %s41
      %p48 = scmp.eq.s32.totalorder %s24, 1
      %p49 = por %p47, %p48
      %p50 = scmp.ne.s32.totalorder %s41, %s42
      %p51 = scmp.eq.s32.totalorder %s24, 0
      %p52 = por %p50, %p51
      %p53 = scmp.ne.s32.totalorder %s41, %s42
      %p54 = scmp.eq.s32.totalorder %s25, 1
      %p55 = por %p53, %p54
      %p57 = scmp.ne.s32.totalorder %s42, %s56
      %p58 = scmp.eq.s32.totalorder %s25, 0
      %p59 = por %p57, %p58
      %s60 = sadd.s32 %s26, %s27
      %s61 = sadd.s32 %s38, %s34
      %s62 = ssub.s32 %s60, %s61
      %p63 = scmp.eq.s32.totalorder %s62, 0
      %s65 = sadd.s32 %s64, 1
      %s66 = scalar_select %p63, %s64, %s65
      %p69 = pneg %p63
      %p70 = scmp.eq.s32.totalorder %s19, 1
      %p71 = por %p69, %p70
      %p72 = scmp.ne.s32.totalorder %s64, %s67
      %p73 = scmp.eq.s32.totalorder %s19, 0
      %p74 = por %p72, %p73
      %p75 = scmp.ne.s32.totalorder %s64, %s67
      %p76 = scmp.eq.s32.totalorder %s24, 1
      %p77 = por %p75, %p76
      %p78 = scmp.ne.s32.totalorder %s67, %s68
      %p79 = scmp.eq.s32.totalorder %s24, 0
      %p80 = por %p78, %p79
      %p81 = scmp.ne.s32.totalorder %s67, %s68
      %p82 = scmp.eq.s32.totalorder %s25, 1
      %p83 = por %p81, %p82
      %p85 = scmp.ne.s32.totalorder %s68, %s84
      %p86 = scmp.eq.s32.totalorder %s25, 0
      %p87 = por %p85, %p86
      %s88 = sadd.s32 %s26, %s27
      %s89 = sadd.s32 %s38, %s34
      %s90 = ssub.s32 %s88, %s89
      %p91 = scmp.eq.s32.totalorder %s90, 0
      %s93 = sadd.s32 %s92, 1
      %s94 = scalar_select %p91, %s92, %s93
      %p97 = pneg %p91
      %p98 = scmp.eq.s32.totalorder %s19, 1
      %p99 = por %p97, %p98
      %p100 = scmp.ne.s32.totalorder %s92, %s95
      %p101 = scmp.eq.s32.totalorder %s19, 0
      %p102 = por %p100, %p101
      %p103 = scmp.ne.s32.totalorder %s92, %s95
      %p104 = scmp.eq.s32.totalorder %s24, 1
      %p105 = por %p103, %p104
      %p106 = scmp.ne.s32.totalorder %s95, %s96
      %p107 = scmp.eq.s32.totalorder %s24, 0
      %p108 = por %p106, %p107
      %p109 = scmp.ne.s32.totalorder %s95, %s96
      %p110 = scmp.eq.s32.totalorder %s25, 1
      %p111 = por %p109, %p110
      %p113 = scmp.ne.s32.totalorder %s96, %s112
      %p114 = scmp.eq.s32.totalorder %s25, 0
      %p115 = por %p113, %p114
      %s116 = sadd.s32 %s26, %s27
      %s117 = sadd.s32 %s38, %s34
      %s118 = ssub.s32 %s116, %s117
      %p119 = scmp.eq.s32.totalorder %s118, 0
      %s121 = sadd.s32 %s120, 1
      %s122 = scalar_select %p119, %s120, %s121
      %p125 = pneg %p119
      %p126 = scmp.eq.s32.totalorder %s19, 1
      %p127 = por %p125, %p126
      %p128 = scmp.ne.s32.totalorder %s120, %s123
      %p129 = scmp.eq.s32.totalorder %s19, 0
      %p130 = por %p128, %p129
      %p131 = scmp.ne.s32.totalorder %s120, %s123
      %p132 = scmp.eq.s32.totalorder %s24, 1
      %p133 = por %p131, %p132
      %p134 = scmp.ne.s32.totalorder %s123, %s124
      %p135 = scmp.eq.s32.totalorder %s24, 0
      %p136 = por %p134, %p135
      %p137 = scmp.ne.s32.totalorder %s123, %s124
      %p138 = scmp.eq.s32.totalorder %s25, 1
      %p139 = por %p137, %p138
      %p141 = scmp.ne.s32.totalorder %s124, %s140
      %p142 = scmp.eq.s32.totalorder %s25, 0
      %p143 = por %p141, %p142
      %s144 = sadd.s32 %s26, %s27
      %s145 = sadd.s32 %s38, %s34
      %s146 = ssub.s32 %s144, %s145
      %p147 = scmp.eq.s32.totalorder %s146, 0
      %s149 = sadd.s32 %s148, 1
      %s150 = scalar_select %p147, %s148, %s149
      %p153 = pneg %p147
      %p154 = scmp.eq.s32.totalorder %s19, 1
      %p155 = por %p153, %p154
      %p156 = scmp.ne.s32.totalorder %s148, %s151
      %p157 = scmp.eq.s32.totalorder %s19, 0
      %p158 = por %p156, %p157
      %p159 = scmp.ne.s32.totalorder %s148, %s151
      %p160 = scmp.eq.s32.totalorder %s24, 1
      %p161 = por %p159, %p160
      %p162 = scmp.ne.s32.totalorder %s151, %s152
      %p163 = scmp.eq.s32.totalorder %s24, 0
      %p164 = por %p162, %p163
      %p165 = scmp.ne.s32.totalorder %s151, %s152
      %p166 = scmp.eq.s32.totalorder %s25, 1
      %p167 = por %p165, %p166
      %p169 = scmp.ne.s32.totalorder %s152, %s168
      %p170 = scmp.eq.s32.totalorder %s25, 0
      %p171 = por %p169, %p170
      %s173 = sadd.s32 %s172, 1
      %p176 = scmp.eq.s32.totalorder %s19, 1
      %p177 = scmp.ne.s32.totalorder %s172, %s174
      %p178 = scmp.eq.s32.totalorder %s19, 0
      %p179 = por %p177, %p178
      %p180 = scmp.ne.s32.totalorder %s172, %s174
      %p181 = scmp.eq.s32.totalorder %s24, 1
      %p182 = por %p180, %p181
      %p183 = scmp.ne.s32.totalorder %s174, %s175
      %p184 = scmp.eq.s32.totalorder %s24, 0
      %p185 = por %p183, %p184
      %p186 = scmp.ne.s32.totalorder %s174, %s175
      %p187 = scmp.eq.s32.totalorder %s25, 1
      %p188 = por %p186, %p187
      %p190 = scmp.ne.s32.totalorder %s175, %s189
      %p191 = scmp.eq.s32.totalorder %s25, 0
      %p192 = por %p190, %p191
      %s193 = ssub.s32 %s26, %s38
      %p194 = scmp.eq.s32.totalorder %s193, 0
      %s196 = sadd.s32 %s195, 1
      %s197 = scalar_select %p194, %s195, %s196
      %p200 = pneg %p194
      %p201 = scmp.eq.s32.totalorder %s19, 1
      %p202 = por %p200, %p201
      %p203 = scmp.ne.s32.totalorder %s195, %s198
      %p204 = scmp.eq.s32.totalorder %s19, 0
      %p205 = por %p203, %p204
      %p206 = scmp.ne.s32.totalorder %s195, %s198
      %p207 = scmp.eq.s32.totalorder %s24, 1
      %p208 = por %p206, %p207
      %p209 = scmp.ne.s32.totalorder %s198, %s199
      %p210 = scmp.eq.s32.totalorder %s24, 0
      %p211 = por %p209, %p210
      %p212 = scmp.ne.s32.totalorder %s198, %s199
      %p213 = scmp.eq.s32.totalorder %s25, 1
      %p214 = por %p212, %p213
      %p216 = scmp.ne.s32.totalorder %s199, %s215
      %p217 = scmp.eq.s32.totalorder %s25, 0
      %p218 = por %p216, %p217
      %p219 = scmp.le.s32.totalorder 1, %s19
      %p220 = scmp.lt.s32.totalorder %s19, 3
      %p221 = pnand %p219, %p220
      %p222 = pneg %p221
      // Predicated region
      $region9: #{tpu_custom_call.1} parent=5 // pred_check
        _
      $region10: #{tpu_custom_call.1} parent=5 // pred_check_branch
        %224 = sbr.rel (%p221) target = $region12
      $region11: #{tpu_custom_call.1} parent=5 // pred_region
        %s225 = ssub.s32 %s19, 1
        // Predicated region
        $region13: #{tpu_custom_call.1} parent=11 // pred_check
          %p226 = pneg %p52
        $region14: #{tpu_custom_call.1} parent=11 // pred_check_branch
          %228 = sbr.rel (%p226) target = $region16
        $region15: #{tpu_custom_call.1} parent=11 // pred_region
          %s230 = ssub.s32 128, 128
          %231 = vsyncadd [#allocation3], %s230
          %s232 = sshll.u32 [#allocation2], 4
          %s233 = int_to_ptr.vmem [resolvable:$true] %s232
          %238 = dma.hbm_to_vmem [thread:$0]  %s0, 128, %s233, [#allocation3], 64, 64, 4
        $region16: #{tpu_custom_call.1} parent=11 // pred_fallthru
          _
        // Predicated region
        $region17: #{tpu_custom_call.1} parent=11 // pred_check
          %p239 = pneg %p185
        $region18: #{tpu_custom_call.1} parent=11 // pred_check_branch
          %241 = sbr.rel (%p239) target = $region20
        $region19: #{tpu_custom_call.1} parent=11 // pred_region
          _
        $region20: #{tpu_custom_call.1} parent=11 // pred_fallthru
          _
      $region12: #{tpu_custom_call.1} parent=5 // pred_fallthru
        _
      %p242 = scmp.lt.s32.totalorder %s19, 2
      // Predicated region
      $region21: #{tpu_custom_call.1} parent=5 // pred_check
        %p243 = pneg %p242
      $region22: #{tpu_custom_call.1} parent=5 // pred_check_branch
        %245 = sbr.rel (%p243) target = $region24
      $region23: #{tpu_custom_call.1} parent=5 // pred_region
        // Predicated region
        $region25: #{tpu_custom_call.1} parent=23 // pred_check
          %p246 = pneg %p74
        $region26: #{tpu_custom_call.1} parent=23 // pred_check_branch
          %248 = sbr.rel (%p246) target = $region28
        $region27: #{tpu_custom_call.1} parent=23 // pred_region
          %s249 = sand.u32 %s19, 1
          %s250 = scalar_lea.sflag [#allocation6], %s249
          %s251 = sand.u32 %s64, 1
          %s252 = smul.addr %s251, 64
          %s253 = scalar_lea.vmem [#allocation5], %s252
          %s254 = sadd.s32 %s26, %s27
          %s256 = ssub.s32 1024, 1024
          %257 = vsyncadd %s250, %s256
          %s258 = smul.addr %s254, 64
          %s259 = scalar_lea.hbm %s1, %s258
          %s260 = sshll.u32 %s253, 4
          %s261 = int_to_ptr.vmem [resolvable:$true] %s260
          %266 = dma.hbm_to_vmem [thread:$0]  %s259, 1024, %s261, %s250, 128, 64, 4
        $region28: #{tpu_custom_call.1} parent=23 // pred_fallthru
          _
        // Predicated region
        $region29: #{tpu_custom_call.1} parent=23 // pred_check
          %p267 = pneg %p102
        $region30: #{tpu_custom_call.1} parent=23 // pred_check_branch
          %269 = sbr.rel (%p267) target = $region32
        $region31: #{tpu_custom_call.1} parent=23 // pred_region
          %s270 = sadd.s32 %s26, %s27
          %p271 = scmp.lt.s32.totalorder %s270, 1
          %s272 = scalar_select %p271, %s270, 1
          %s273 = scalar_lea.vmem %s2, %s272
          %s274 = sadd.s32 %s26, %s27
        $region32: #{tpu_custom_call.1} parent=23 // pred_fallthru
          _
        // Predicated region
        $region33: #{tpu_custom_call.1} parent=23 // pred_check
          %p275 = pneg %p130
        $region34: #{tpu_custom_call.1} parent=23 // pred_check_branch
          %277 = sbr.rel (%p275) target = $region36
        $region35: #{tpu_custom_call.1} parent=23 // pred_region
          %s278 = sadd.s32 %s26, %s27
          %p279 = scmp.lt.s32.totalorder %s278, 1
          %s280 = scalar_select %p279, %s278, 1
          %s281 = scalar_lea.vmem %s3, %s280
          %s282 = sadd.s32 %s26, %s27
        $region36: #{tpu_custom_call.1} parent=23 // pred_fallthru
          _
        // Predicated region
        $region37: #{tpu_custom_call.1} parent=23 // pred_check
          %p283 = pneg %p158
        $region38: #{tpu_custom_call.1} parent=23 // pred_check_branch
          %285 = sbr.rel (%p283) target = $region40
        $region39: #{tpu_custom_call.1} parent=23 // pred_region
          %s286 = sand.u32 %s19, 1
          %s287 = scalar_lea.sflag [#allocation6], %s286
          %s288 = sand.u32 %s148, 1
          %s289 = smul.addr %s288, 64
          %s290 = scalar_lea.vmem [#allocation7], %s289
          %s291 = sadd.s32 %s26, %s27
          %s292 = smul.u32 16, %s291
          %s294 = ssub.s32 1024, 1024
          %295 = vsyncadd %s287, %s294
          %s296 = smul.addr %s292, 64
          %s297 = scalar_lea.hbm %s4, %s296
          %s298 = sshll.u32 %s290, 4
          %s299 = int_to_ptr.vmem [resolvable:$true] %s298
          %304 = dma.hbm_to_vmem [thread:$0]  %s297, 1024, %s299, %s287, 64, 64, 4
        $region40: #{tpu_custom_call.1} parent=23 // pred_fallthru
          _
      $region24: #{tpu_custom_call.1} parent=5 // pred_fallthru
        _
      %p305 = scmp.le.s32.totalorder 1, %s19
      %p306 = scmp.lt.s32.totalorder %s19, 3
      %p307 = pnand %p305, %p306
      %p308 = pneg %p307
      // Predicated region
      $region41: #{tpu_custom_call.1} parent=5 // pred_check
        _
      $region42: #{tpu_custom_call.1} parent=5 // pred_check_branch
        %310 = sbr.rel (%p307) target = $region44
      $region43: #{tpu_custom_call.1} parent=5 // pred_region
        %s311 = ssub.s32 %s19, 1
        // Predicated region
        $region45: #{tpu_custom_call.1} parent=43 // pred_check
          %p312 = pneg %p52
        $region46: #{tpu_custom_call.1} parent=43 // pred_check_branch
          %314 = sbr.rel (%p312) target = $region48
        $region47: #{tpu_custom_call.1} parent=43 // pred_region
          %315 = dma.done [#allocation3], 128
        $region48: #{tpu_custom_call.1} parent=43 // pred_fallthru
          _
        %s316 = sand.u32 %s24, 1
        %s317 = scalar_lea.sflag [#allocation6], %s316
        %s318 = sand.u32 %s67, 1
        %s319 = smul.addr %s318, 64
        %s320 = scalar_lea.vmem [#allocation5], %s319
        // Predicated region
        $region49: #{tpu_custom_call.1} parent=43 // pred_check
          %p321 = pneg %p80
        $region50: #{tpu_custom_call.1} parent=43 // pred_check_branch
          %323 = sbr.rel (%p321) target = $region52
        $region51: #{tpu_custom_call.1} parent=43 // pred_region
          %324 = dma.done %s317, 1024
        $region52: #{tpu_custom_call.1} parent=43 // pred_fallthru
          _
        %s325 = sand.u32 %s24, 1
        %s326 = scalar_lea.sflag [#allocation6], %s325
        %s327 = sand.u32 %s151, 1
        %s328 = smul.addr %s327, 64
        %s329 = scalar_lea.vmem [#allocation7], %s328
        // Predicated region
        $region53: #{tpu_custom_call.1} parent=43 // pred_check
          %p330 = pneg %p164
        $region54: #{tpu_custom_call.1} parent=43 // pred_check_branch
          %332 = sbr.rel (%p330) target = $region56
        $region55: #{tpu_custom_call.1} parent=43 // pred_region
          %333 = dma.done %s326, 1024
        $region56: #{tpu_custom_call.1} parent=43 // pred_fallthru
          _
        %p334 = pneg %p52
        %p335 = pneg %p49
        %s336 = sand.u32 %s24, 1
        %s337 = scalar_lea.sflag [#allocation6], %s336
        %s338 = sand.u32 %s67, 1
        %s339 = smul.addr %s338, 64
        %s340 = scalar_lea.vmem [#allocation5], %s339
        %p341 = pneg %p80
        %p342 = pneg %p77
        %s343 = sadd.s32 %s28, %s29
        %p344 = scmp.lt.s32.totalorder %s343, 1
        %s345 = scalar_select %p344, %s343, 1
        %s346 = scalar_lea.vmem %s2, %s345
        %p347 = pneg %p108
        %p348 = pneg %p105
        %s349 = sadd.s32 %s28, %s29
        %p350 = scmp.lt.s32.totalorder %s349, 1
        %s351 = scalar_select %p350, %s349, 1
        %s352 = scalar_lea.vmem %s3, %s351
        %p353 = pneg %p136
        %p354 = pneg %p133
        %s355 = sand.u32 %s24, 1
        %s356 = scalar_lea.sflag [#allocation6], %s355
        %s357 = sand.u32 %s151, 1
        %s358 = smul.addr %s357, 64
        %s359 = scalar_lea.vmem [#allocation7], %s358
        %p360 = pneg %p164
        %p361 = pneg %p161
        %p362 = pneg %p185
        %p363 = pneg %p182
        %p364 = pneg %p211
        %p365 = pneg %p208
        %s366 = sand.u32 %s198, 1
        %s367 = scalar_lea.sflag [#allocation4], %s366
        %s368 = sand.u32 %s198, 1
        %s369 = smul.addr %s368, 16
        %s370 = scalar_lea.vmem [#allocation8], %s369
        %s371 = sadd.s32 %s28, %s29
        %s372 = sadd.s32 %s28, %s29
        %p373 = scmp.lt.s32.totalorder %s372, 1
        %s374 = scalar_select %p373, %s372, 1
        %s375 = scalar_lea.vmem %s2, %s374
        %s376 = sadd.s32 %s28, %s29
        %s377 = sadd.s32 %s28, %s29
        %p378 = scmp.lt.s32.totalorder %s377, 1
        %s379 = scalar_select %p378, %s377, 1
        %s380 = scalar_lea.vmem %s3, %s379
        %s381 = sadd.s32 %s28, %s29
        %s382 = sadd.s32 %s28, %s29
        %s383 = smul.u32 16, %s382
        %p385 = scmp.eq.s32.totalorder %s29, 0
        %p386 = scmp.eq.s32.totalorder %s28, 0
        %p387 = pnand %p385, %p386
        %p388 = pneg %p387
        // Predicated region
        $region57: #{tpu_custom_call.1} parent=43 // pred_check
          _
        $region58: #{tpu_custom_call.1} parent=43 // pred_check_branch
          %390 = sbr.rel (%p387) target = $region60
        $region59: #{tpu_custom_call.1} parent=43 // pred_region
          %v391 = vld [vmem:[%s5] sm:$0x1]
          %v393 = vlaneseq
          %v394 = vshrl.u32 %v393, 7
          %v395 = vsub.s32 0, %v394
          %v396 = vrot.slane %v391, %v395
          %398 = vst [vmem:[%s370] sm:$0xff] %v396
          %399 = vst [vmem:[%s370 + $0x8] sm:$0xff] %v396
        $region60: #{tpu_custom_call.1} parent=43 // pred_fallthru
          _
        %p400 = scmp.ne.s32.totalorder %s28, 0
        %p401 = pnand %p385, %p400
        %p402 = pneg %p401
        // Predicated region
        $region61: #{tpu_custom_call.1} parent=43 // pred_check
          _
        $region62: #{tpu_custom_call.1} parent=43 // pred_check_branch
          %404 = sbr.rel (%p401) target = $region64
        $region63: #{tpu_custom_call.1} parent=43 // pred_region
          %405 = vst [vmem:[%s370] sm:$0xff] 0.0
          %406 = vst [vmem:[%s370 + $0x8] sm:$0xff] 0.0
        $region64: #{tpu_custom_call.1} parent=43 // pred_fallthru
          _
        %v407 = vld [vmem:[#allocation2] sm:$0xf]
        %v408 = vld [vmem:[#allocation2 + $0x4] sm:$0xf]
        %v409 = vld [vmem:[%s320] sm:$0xf]
        %v410 = vld [vmem:[%s320 + $0x4] sm:$0xf]
        %v411 = vld [vmem:[%s320 + $0x8] sm:$0xf]
        %v412 = vld [vmem:[%s320 + $0xc] sm:$0xf]
        %v413 = vld [vmem:[%s320 + $0x10] sm:$0xf]
        %v414 = vld [vmem:[%s320 + $0x14] sm:$0xf]
        %v415 = vld [vmem:[%s320 + $0x18] sm:$0xf]
        %v416 = vld [vmem:[%s320 + $0x1c] sm:$0xf]
        %v417 = vld [vmem:[%s320 + $0x20] sm:$0xf]
        %v418 = vld [vmem:[%s320 + $0x24] sm:$0xf]
        %v419 = vld [vmem:[%s320 + $0x28] sm:$0xf]
        %v420 = vld [vmem:[%s320 + $0x2c] sm:$0xf]
        %v421 = vld [vmem:[%s320 + $0x30] sm:$0xf]
        %v422 = vld [vmem:[%s320 + $0x34] sm:$0xf]
        %v423 = vld [vmem:[%s320 + $0x38] sm:$0xf]
        %v424 = vld [vmem:[%s320 + $0x3c] sm:$0xf]
        %v427 = vunpack.c.l.b16 %v407
        %v428 = vunpack.c.l.b16 %v408
        %v429 = vpack.c.b16 %v428, %v427
        %v447 = vunpack.c.l.b16 %v409
        %v448 = vunpack.c.l.b16 %v410
        %v449 = vunpack.c.l.b16 %v411
        %v450 = vunpack.c.l.b16 %v412
        %v451 = vunpack.c.l.b16 %v413
        %v452 = vunpack.c.l.b16 %v414
        %v453 = vunpack.c.l.b16 %v415
        %v454 = vunpack.c.l.b16 %v416
        %v455 = vunpack.c.l.b16 %v417
        %v456 = vunpack.c.l.b16 %v418
        %v457 = vunpack.c.l.b16 %v419
        %v458 = vunpack.c.l.b16 %v420
        %v459 = vunpack.c.l.b16 %v421
        %v460 = vunpack.c.l.b16 %v422
        %v461 = vunpack.c.l.b16 %v423
        %v462 = vunpack.c.l.b16 %v424
        %v463 = vpack.c.b16 %v448, %v447
        %v464 = vpack.c.b16 %v450, %v449
        %v465 = vpack.c.b16 %v452, %v451
        %v466 = vpack.c.b16 %v454, %v453
        %v467 = vpack.c.b16 %v456, %v455
        %v468 = vpack.c.b16 %v458, %v457
        %v469 = vpack.c.b16 %v460, %v459
        %v470 = vpack.c.b16 %v462, %v461
        %479 = vmatprep.subr.bf16.mxu0 0
        %480 = vmatpush1.bf16.msra.mxu0 %v470
        %481 = vmatprep.subr.bf16.mxu0 0
        %482 = vmatpush1.bf16.msra.mxu0 %v469
        %483 = vmatprep.subr.bf16.mxu0 0
        %484 = vmatpush1.bf16.msra.mxu0 %v468
        %485 = vmatprep.subr.bf16.mxu0 0
        %486 = vmatpush1.bf16.msra.mxu0 %v467
        %487 = vmatprep.subr.bf16.mxu0 0
        %488 = vmatpush1.bf16.msra.mxu0 %v466
        %489 = vmatprep.subr.bf16.mxu0 0
        %490 = vmatpush1.bf16.msra.mxu0 %v465
        %491 = vmatprep.subr.bf16.mxu0 0
        %492 = vmatpush1.bf16.msra.mxu0 %v464
        %493 = vmatprep.subr.bf16.mxu0 0
        %494 = vmatpush1.bf16.msra.mxu0 %v463
        %495 = vmatprep.subr.bf16.mxu0 0
        %496 = vmatpush2.bf16.msra.mxu0 0
        %497 = vmatprep.subr.bf16.mxu0 0
        %498 = vmatpush2.bf16.msra.mxu0 0
        %499 = vmatprep.subr.bf16.mxu0 0
        %500 = vmatpush2.bf16.msra.mxu0 0
        %501 = vmatprep.subr.bf16.mxu0 0
        %502 = vmatpush2.bf16.msra.mxu0 0
        %503 = vmatprep.subr.bf16.mxu0 0
        %504 = vmatpush2.bf16.msra.mxu0 0
        %505 = vmatprep.subr.bf16.mxu0 0
        %506 = vmatpush2.bf16.msra.mxu0 0
        %507 = vmatprep.subr.bf16.mxu0 0
        %508 = vmatpush2.bf16.msra.mxu0 0
        %509 = vmatprep.subr.bf16.mxu0 0
        %510 = vmatpush2.bf16.msra.mxu0 0
        %511 = vmatprep.mubr.bf16.mxu0 0
        %512 = vmatmul.mubr.bf16.gmra.mxu0 %v429
        %v513 = vpop.f32.mrf.mxu0
        %v514 = vadd.f32 0.0, %v513
        %v515 = vpop.f32.mrf.mxu0
        %v516 = vpop.f32.mrf.mxu0
        %v517 = vadd.f32 0.0, %v516
        %v518 = vpop.f32.mrf.mxu0
        %519 = vdwg.mxu0
        %v520 = vadd.f32 %v514, %v517
        %v521 = vrot.slane %v520, 4
        %v522 = vadd.f32 %v520, %v521
        %v523 = vrot.slane %v522, 2
        %v524 = vadd.f32 %v522, %v523
        %v525 = vrot.slane %v524, 1
        %v526 = vadd.f32 %v524, %v525
        %v527 = vrcp.pop 16.0
        %v528 = vmul.f32 %v526, %v527
        %v529 = vmul.f32 %v514, %v514
        %v530 = vmul.f32 %v517, %v517
        %v531 = vadd.f32 %v529, %v530
        %v532 = vrot.slane %v531, 4
        %v533 = vadd.f32 %v531, %v532
        %v534 = vrot.slane %v533, 2
        %v535 = vadd.f32 %v533, %v534
        %v536 = vrot.slane %v535, 1
        %v537 = vadd.f32 %v535, %v536
        %v538 = vmul.f32 %v537, %v527
        %v539 = vmul.f32 %v528, %v528
        %v540 = vsub.f32 %v538, %v539
        %v541 = vmax.f32 %v540, 0.0
        %v542 = vld [vmem:[%s375] sm:$0x1]
        %v543 = vadd.f32 %v541, 1e-05
        %v544 = vrsqrt.pop %v543
        %v545 = vmul.f32 %v542, %v544
        %v546 = vld [vmem:[%s380] sm:$0x1]
        %v547 = vmul.f32 %v545, %v528
        %v548 = vsub.f32 %v546, %v547
        %v550 = vlaneseq
        %v551 = vshrl.u32 %v550, 7
        %v552 = vsub.s32 0, %v551
        %v553 = vrot.slane %v545, %v552
        %v555 = vmul.f32 %v514, %v553
        %v556 = vmul.f32 %v517, %v553
        %v558 = vlaneseq
        %v559 = vshrl.u32 %v558, 7
        %v560 = vsub.s32 0, %v559
        %v561 = vrot.slane %v548, %v560
        %v563 = vadd.f32 %v555, %v561
        %v564 = vadd.f32 %v556, %v561
        %v565 = vmax.f32 %v563, 0.0
        %v566 = vmax.f32 %v564, 0.0
        %v567 = vld [vmem:[%s370] sm:$0xff]
        %v568 = vld [vmem:[%s370 + $0x8] sm:$0xff]
        %v569 = vpack.c.bf16 %v566, %v565
        %v570 = vld [vmem:[%s329] sm:$0xf]
        %v571 = vld [vmem:[%s329 + $0x4] sm:$0xf]
        %v572 = vld [vmem:[%s329 + $0x8] sm:$0xf]
        %v573 = vld [vmem:[%s329 + $0xc] sm:$0xf]
        %v574 = vld [vmem:[%s329 + $0x10] sm:$0xf]
        %v575 = vld [vmem:[%s329 + $0x14] sm:$0xf]
        %v576 = vld [vmem:[%s329 + $0x18] sm:$0xf]
        %v577 = vld [vmem:[%s329 + $0x1c] sm:$0xf]
        %v578 = vld [vmem:[%s329 + $0x20] sm:$0xf]
        %v579 = vld [vmem:[%s329 + $0x24] sm:$0xf]
        %v580 = vld [vmem:[%s329 + $0x28] sm:$0xf]
        %v581 = vld [vmem:[%s329 + $0x2c] sm:$0xf]
        %v582 = vld [vmem:[%s329 + $0x30] sm:$0xf]
        %v583 = vld [vmem:[%s329 + $0x34] sm:$0xf]
        %v584 = vld [vmem:[%s329 + $0x38] sm:$0xf]
        %v585 = vld [vmem:[%s329 + $0x3c] sm:$0xf]
        %v602 = vunpack.c.l.b16 %v570
        %v603 = vunpack.c.l.b16 %v571
        %v604 = vunpack.c.l.b16 %v572
        %v605 = vunpack.c.l.b16 %v573
        %v606 = vunpack.c.l.b16 %v574
        %v607 = vunpack.c.l.b16 %v575
        %v608 = vunpack.c.l.b16 %v576
        %v609 = vunpack.c.l.b16 %v577
        %v610 = vunpack.c.l.b16 %v578
        %v611 = vunpack.c.l.b16 %v579
        %v612 = vunpack.c.l.b16 %v580
        %v613 = vunpack.c.l.b16 %v581
        %v614 = vunpack.c.l.b16 %v582
        %v615 = vunpack.c.l.b16 %v583
        %v616 = vunpack.c.l.b16 %v584
        %v617 = vunpack.c.l.b16 %v585
        %v618 = vpack.c.b16 %v603, %v602
        %v619 = vpack.c.b16 %v605, %v604
        %v620 = vpack.c.b16 %v607, %v606
        %v621 = vpack.c.b16 %v609, %v608
        %v622 = vpack.c.b16 %v611, %v610
        %v623 = vpack.c.b16 %v613, %v612
        %v624 = vpack.c.b16 %v615, %v614
        %v625 = vpack.c.b16 %v617, %v616
        %634 = vmatprep.subr.bf16.mxu0 0
        %635 = vmatpush1.bf16.msra.mxu0 %v625
        %636 = vmatprep.subr.bf16.mxu0 0
        %637 = vmatpush1.bf16.msra.mxu0 %v624
        %638 = vmatprep.subr.bf16.mxu0 0
        %639 = vmatpush1.bf16.msra.mxu0 %v623
        %640 = vmatprep.subr.bf16.mxu0 0
        %641 = vmatpush1.bf16.msra.mxu0 %v622
        %642 = vmatprep.subr.bf16.mxu0 0
        %643 = vmatpush1.bf16.msra.mxu0 %v621
        %644 = vmatprep.subr.bf16.mxu0 0
        %645 = vmatpush1.bf16.msra.mxu0 %v620
        %646 = vmatprep.subr.bf16.mxu0 0
        %647 = vmatpush1.bf16.msra.mxu0 %v619
        %648 = vmatprep.subr.bf16.mxu0 0
        %649 = vmatpush1.bf16.msra.mxu0 %v618
        %650 = vmatprep.subr.bf16.mxu0 0
        %651 = vmatpush2.bf16.msra.mxu0 0
        %652 = vmatprep.subr.bf16.mxu0 0
        %653 = vmatpush2.bf16.msra.mxu0 0
        %654 = vmatprep.subr.bf16.mxu0 0
        %655 = vmatpush2.bf16.msra.mxu0 0
        %656 = vmatprep.subr.bf16.mxu0 0
        %657 = vmatpush2.bf16.msra.mxu0 0
        %658 = vmatprep.subr.bf16.mxu0 0
        %659 = vmatpush2.bf16.msra.mxu0 0
        %660 = vmatprep.subr.bf16.mxu0 0
        %661 = vmatpush2.bf16.msra.mxu0 0
        %662 = vmatprep.subr.bf16.mxu0 0
        %663 = vmatpush2.bf16.msra.mxu0 0
        %664 = vmatprep.subr.bf16.mxu0 0
        %665 = vmatpush2.bf16.msra.mxu0 0
        %666 = vmatprep.mubr.bf16.mxu0 0
        %667 = vmatmul.mubr.bf16.gmra.mxu0 %v569
        %v668 = vpop.f32.mrf.mxu0
        %v669 = vadd.f32 0.0, %v668
        %v670 = vpop.f32.mrf.mxu0
        %v671 = vpop.f32.mrf.mxu0
        %v672 = vadd.f32 0.0, %v671
        %v673 = vpop.f32.mrf.mxu0
        %674 = vdwg.mxu0
        %v675 = vadd.f32 %v567, %v669
        %v676 = vadd.f32 %v568, %v672
        %677 = vst [vmem:[%s370] sm:$0xff] %v675
        %678 = vst [vmem:[%s370 + $0x8] sm:$0xff] %v676
        %s679 = sand.u32 %s198, 1
        %s680 = scalar_lea.sflag [#allocation4], %s679
        %s681 = sand.u32 %s198, 1
        %s682 = smul.addr %s681, 16
        %s683 = scalar_lea.vmem [#allocation8], %s682
        // Predicated region
        $region65: #{tpu_custom_call.1} parent=43 // pred_check
          %p684 = pneg %p208
        $region66: #{tpu_custom_call.1} parent=43 // pred_check_branch
          %686 = sbr.rel (%p684) target = $region68
        $region67: #{tpu_custom_call.1} parent=43 // pred_region
          %s688 = ssub.s32 256, 256
          %689 = vsyncadd %s680, %s688
          %s690 = smul.addr %s28, 2
          %s691 = smul.addr %s690, 128
          %s692 = scalar_lea.hbm %s6, %s691
          %s693 = sshll.u32 %s683, 4
          %s694 = int_to_ptr.vmem [resolvable:$true] %s693
          %699 = dma.vmem_to_hbm [thread:$0]  %s694, 256, %s692, %s680, 128, 128, 8
        $region68: #{tpu_custom_call.1} parent=43 // pred_fallthru
          _
      $region44: #{tpu_custom_call.1} parent=5 // pred_fallthru
        _
      %p700 = scmp.le.s32.totalorder 2, %s19
      // Predicated region
      $region69: #{tpu_custom_call.1} parent=5 // pred_check
        %p701 = pneg %p700
      $region70: #{tpu_custom_call.1} parent=5 // pred_check_branch
        %703 = sbr.rel (%p701) target = $region72
      $region71: #{tpu_custom_call.1} parent=5 // pred_region
        %s704 = ssub.s32 %s19, 2
        // Predicated region
        $region73: #{tpu_custom_call.1} parent=71 // pred_check
          %p705 = pneg %p214
        $region74: #{tpu_custom_call.1} parent=71 // pred_check_branch
          %707 = sbr.rel (%p705) target = $region76
        $region75: #{tpu_custom_call.1} parent=71 // pred_region
          %s708 = sand.u32 %s199, 1
          %s709 = scalar_lea.sflag [#allocation4], %s708
          %s710 = sand.u32 %s199, 1
          %s711 = smul.addr %s710, 16
          %s712 = scalar_lea.vmem [#allocation8], %s711
          %713 = dma.done %s709, 256
        $region76: #{tpu_custom_call.1} parent=71 // pred_fallthru
          _
      $region72: #{tpu_custom_call.1} parent=5 // pred_fallthru
        _
    $region6: #{tpu_custom_call.1} parent=1 // loop_footer
      %s23 = sadd.s32 1, %s19
    $region7: #{tpu_custom_call.1} parent=1 // loop_footer_branch
      %18 = sbr.rel target = $region3
    $region8: #{tpu_custom_call.1} parent=1 // loop_exit
      _
    %714 = vsyncpa [#allocation3], 1
    %s715 = scalar_lea.sflag [#allocation3], 1
    %716 = vsyncpa %s715, 1
    %717 = vsyncpa [#allocation6], 1
    %s718 = scalar_lea.sflag [#allocation6], 1
    %719 = vsyncpa %s718, 1
    %720 = vsyncpa [#allocation4], 1
    %s721 = scalar_lea.sflag [#allocation4], 1
    %722 = vsyncpa %s721, 1

</llo_original>
